<compile_context>
chip_gen: v6e
topology: v6e:2x2x1
jax: 0.10.0
libtpu: 0.0.40
codegen_flags: <defaults>
</compile_context>

<pallas_src>
import functools

import jax
import jax.numpy as jnp
from jax import lax
from jax.experimental import pallas as pl
from jax.experimental.pallas import tpu as pltpu

LANE = 128  # TPU lane width; feature dims are padded to a multiple of this.


def _round_up(x, m):
    return (x + m - 1) // m * m


# -----------------------------------------------------------------------------
# Fused multi-layer kernel.
#   grid = (num_layers, num_row_tiles, num_k_tiles)
#   Layer l reads its input activations from scratch slot (l-1) % 2 and writes
#   its output activations to slot l % 2.  The input features X and the int8
#   adjacency A are DMA'd from HBM into VMEM exactly once at the first step.
#   A is stored in VMEM as K-column blocks stacked along the sublane axis:
#   rows [kk*n_pad, (kk+1)*n_pad) of a_vmem hold A[:, kk*tile_k:(kk+1)*tile_k],
#   so all in-kernel dynamic slicing stays on the sublane axis.
# -----------------------------------------------------------------------------
def _fused_net_kernel(tile_m, tile_k, n_pad,
                      blk_ref,                       # scalar prefetch (SMEM)
                      a_hbm, x_hbm,                  # memory_space=ANY inputs
                      wl_ref, wr_ref, scale_ref, shift_ref, dinv_ref,
                      o_ref,
                      a_vmem, acc_ref, act_ref, dma_sem):
    l = pl.program_id(0)
    i = pl.program_id(1)
    k = pl.program_id(2)
    nl = pl.num_programs(0)
    nk = pl.num_programs(2)
    nkt = n_pad // tile_k                     # static

    write_slot = l % 2
    read_slot = 1 - write_slot

    # --- One-time staging: A (int8) and X (bf16) HBM -> VMEM. ------------------
    @pl.when((l == 0) & (i == 0) & (k == 0))
    def _():
        cp_x = pltpu.make_async_copy(
            x_hbm, act_ref.at[pl.ds(n_pad, n_pad), :], dma_sem.at[nkt])
        cp_x.start()
        copies = []
        for kk in range(nkt):                 # static unroll: one DMA per K block
            cp = pltpu.make_async_copy(
                a_hbm.at[:, pl.ds(kk * tile_k, tile_k)],
                a_vmem.at[pl.ds(kk * n_pad, n_pad), :],
                dma_sem.at[kk])
            cp.start()
            copies.append(cp)
        for cp in copies:
            cp.wait()
        cp_x.wait()

    @pl.when(k == 0)
    def _():
        acc_ref[...] = jnp.zeros_like(acc_ref)

    # --- K step: acc += A01[i, k] @ H[k]  (skip all-zero A tiles). -------------
    @pl.when(blk_ref[i * nkt + k] != 0)
    def _():
        off_a = pl.multiple_of(k * n_pad + i * tile_m, tile_m)
        a_tile = a_vmem[pl.ds(off_a, tile_m), :]              # (tile_m, tile_k) int8
        off_k = pl.multiple_of(read_slot * n_pad + k * tile_k, tile_k)
        hk = act_ref[pl.ds(off_k, tile_k), :]                 # (tile_k, f_pad) bf16
        acc_ref[...] += jnp.dot(a_tile.astype(jnp.bfloat16), hk,
                                preferred_element_type=jnp.float32)

    # --- Epilogue at last K step: 1/deg, projections, BN(+bias), ReLU, store. --
    @pl.when(k == nk - 1)
    def _():
        off_i = pl.multiple_of(read_slot * n_pad + i * tile_m, tile_m)
        hi = act_ref[pl.ds(off_i, tile_m), :]                 # (tile_m, f_pad) bf16

        aggr = acc_ref[...] * dinv_ref[...]                   # mean aggregation (f32)
        # Two dots (no concatenate): aggr @ W_l + x @ W_r, f32 accumulation.
        y = jnp.dot(aggr.astype(jnp.bfloat16), wl_ref[0],
                    preferred_element_type=jnp.float32)
        y = y + jnp.dot(hi, wr_ref[0], preferred_element_type=jnp.float32)
        # BatchNorm (eval) + lin_l bias folded into per-channel scale/shift.
        y = y * scale_ref[0] + shift_ref[0]

        is_last = l == nl - 1

        @pl.when(jnp.logical_not(is_last))
        def _():
            # ReLU only on non-final layers; dropout(p=0.2) is identity at eval.
            off_o = pl.multiple_of(write_slot * n_pad + i * tile_m, tile_m)
            act_ref[pl.ds(off_o, tile_m), :] = jnp.maximum(y, 0.0).astype(
                act_ref.dtype)

        @pl.when(is_last)
        def _():
            o_ref[...] = y


# -----------------------------------------------------------------------------
# Wrapper: padding, weight packing (bias/BN fold), pallas_call.
# -----------------------------------------------------------------------------
def _pack_layer_params(params, f_pad, eps):
    """Per-layer W_l / W_r (bf16) and folded scale/shift (f32)."""
    convs, bns = params["convs"], params["bns"]
    num_layers = len(convs)
    wl_list, wr_list, sc_list, sh_list = [], [], [], []
    for li, conv in enumerate(convs):
        f_in, f_out = conv["w_l"].shape
        wl = jnp.zeros((f_pad, f_pad), jnp.float32).at[:f_in, :f_out].set(conv["w_l"])
        wr = jnp.zeros((f_pad, f_pad), jnp.float32).at[:f_in, :f_out].set(conv["w_r"])
        if li < num_layers - 1:
            bn = bns[li]
            s = bn["gamma"] * lax.rsqrt(bn["running_var"] + eps)
            sh = bn["beta"] + (conv["b_l"] - bn["running_mean"]) * s
        else:
            s = jnp.ones((f_out,), jnp.float32)
            sh = conv["b_l"]
        wl_list.append(wl)
        wr_list.append(wr)
        sc_list.append(jnp.zeros((f_pad,), jnp.float32).at[:f_out].set(s))
        sh_list.append(jnp.zeros((f_pad,), jnp.float32).at[:f_out].set(sh))
    wl_stack = jnp.stack(wl_list).astype(jnp.bfloat16)    # (L, F, F) bf16
    wr_stack = jnp.stack(wr_list).astype(jnp.bfloat16)    # (L, F, F) bf16
    scale_stack = jnp.stack(sc_list)[:, None, :]           # (L, 1, F) f32
    shift_stack = jnp.stack(sh_list)[:, None, :]           # (L, 1, F) f32
    return wl_stack, wr_stack, scale_stack, shift_stack


def net_forward(x, a01, deg, params, eps=1e-5, max_tile_m=256, max_tile_k=1024):
    """x: (N, F_in) f32.  a01: (N, N) integer adjacency (edge counts, dst<-src).
    deg: (N,) in-degree (row sum of a01)."""
    n, f_in = x.shape
    convs = params["convs"]
    num_layers = len(convs)
    f_out = convs[-1]["w_l"].shape[1]
    dims = [c["w_l"].shape[0] for c in convs] + [f_out]
    f_pad = _round_up(max(dims), LANE)

    # Decoupled tiles: modest M tile, large K tile (amortize per-step overhead).
    tile_m = min(max_tile_m, _round_up(n, LANE))
    tile_k = min(max_tile_k, _round_up(n, LANE))
    tile_k = max(tile_k, tile_m)
    tile_k = (tile_k // tile_m) * tile_m         # multiple of tile_m
    n_pad = _round_up(n, tile_k)                 # divisible by tile_m and tile_k
    nm, nkt = n_pad // tile_m, n_pad // tile_k

    # Pad node-level inputs.  A stays integer (int8), features go bf16.
    x_p = jnp.zeros((n_pad, f_pad), jnp.bfloat16).at[:n, :f_in].set(
        x.astype(jnp.bfloat16))
    a_p = jnp.zeros((n_pad, n_pad), jnp.int8).at[:n, :n].set(a01.astype(jnp.int8))
    dinv = jnp.zeros((n_pad, 1), jnp.float32).at[:n, 0].set(
        jnp.where(deg > 0, 1.0 / jnp.maximum(deg, 1.0), 0.0))

    # Per-(row-tile, k-tile) nonzero mask (block sparsity), flattened for SMEM.
    blk_mask = jnp.any(
        a_p.reshape(nm, tile_m, nkt, tile_k) != 0, axis=(1, 3)
    ).astype(jnp.int32).reshape(-1)

    wl_stack, wr_stack, scale_stack, shift_stack = _pack_layer_params(
        params, f_pad, eps)

    # Explicit VMEM budget (resident A + activation ping-pong + small tiles).
    # For very large clusters on v7x (64 MiB VMEM) this layout stops fitting
    # around N ~ 5-6K; a streamed-A fallback would then be needed.
    needed = (n_pad * n_pad                       # resident A (int8)
              + 2 * n_pad * f_pad * 2             # activation ping-pong (bf16)
              + tile_m * f_pad * 4                # f32 accumulator
              + 2 * tile_m * f_pad * 4            # output double buffer (f32)
              + 2 * 2 * f_pad * f_pad * 2         # W_l + W_r double-buffered
              + 4 * 2 * f_pad * 4                 # scale/shift double-buffered
              + 2 * tile_m * 4)                   # dinv double-buffered
    vmem_limit = int(min(max(needed + (8 << 20), 32 << 20), 120 << 20))

    grid = (num_layers, nm, nkt)
    kernel = functools.partial(_fused_net_kernel, tile_m, tile_k, n_pad)

    out = pl.pallas_call(
        kernel,
        out_shape=jax.ShapeDtypeStruct((n_pad, f_pad), jnp.float32),
        grid_spec=pltpu.PrefetchScalarGridSpec(
            num_scalar_prefetch=1,
            grid=grid,
            in_specs=[
                pl.BlockSpec(memory_space=pl.ANY),   # A (int8), staged once
                pl.BlockSpec(memory_space=pl.ANY),   # X (bf16), staged once
                pl.BlockSpec((1, f_pad, f_pad), lambda l, i, k, blk: (l, 0, 0)),  # W_l
                pl.BlockSpec((1, f_pad, f_pad), lambda l, i, k, blk: (l, 0, 0)),  # W_r
                pl.BlockSpec((1, 1, f_pad), lambda l, i, k, blk: (l, 0, 0)),      # scale
                pl.BlockSpec((1, 1, f_pad), lambda l, i, k, blk: (l, 0, 0)),      # shift
                pl.BlockSpec((tile_m, 1), lambda l, i, k, blk: (i, 0)),           # 1/deg
            ],
            out_specs=pl.BlockSpec((tile_m, f_pad), lambda l, i, k, blk: (i, 0)),
            scratch_shapes=[
                pltpu.VMEM((nkt * n_pad, tile_k), jnp.int8),     # resident A
                pltpu.VMEM((tile_m, f_pad), jnp.float32),        # aggregation acc
                pltpu.VMEM((2 * n_pad, f_pad), jnp.bfloat16),    # act ping-pong
                pltpu.SemaphoreType.DMA((nkt + 1,)),             # staging DMAs
            ],
        ),
        compiler_params=pltpu.CompilerParams(
            # All axes sequential: layer & K are true dependences; row tiles
            # must stay sequential because layers communicate through the
            # per-core VMEM activation scratch.
            dimension_semantics=("arbitrary", "arbitrary", "arbitrary"),
            vmem_limit_bytes=vmem_limit,
        ),
    )(blk_mask, a_p, x_p, wl_stack, wr_stack, scale_stack, shift_stack, dinv)

    return out[:n, :f_out]


# -----------------------------------------------------------------------------
# Parameter init, adjacency construction, pure-JAX reference.
# -----------------------------------------------------------------------------
def init_params(key, in_channels, hidden_channels, out_channels, num_layers):
    dims = [in_channels] + [hidden_channels] * (num_layers - 1) + [out_channels]
    convs, bns = [], []
    for li in range(num_layers):
        f_in, f_out = dims[li], dims[li + 1]
        key, k1, k2, k3, k4 = jax.random.split(key, 5)
        convs.append({
            "w_l": jax.random.normal(k1, (f_in, f_out), jnp.float32) * 0.1,
            "b_l": jax.random.normal(k3, (f_out,), jnp.float32) * 0.1,
            "w_r": jax.random.normal(k2, (f_in, f_out), jnp.float32) * 0.1,
        })
        if li < num_layers - 1:
            kg, kb, km, kv = jax.random.split(k4, 4)
            bns.append({
                "gamma": 1.0 + 0.1 * jax.random.normal(kg, (f_out,), jnp.float32),
                "beta": 0.1 * jax.random.normal(kb, (f_out,), jnp.float32),
                "running_mean": 0.1 * jax.random.normal(km, (f_out,), jnp.float32),
                "running_var": 1.0 + 0.1 * jax.random.uniform(kv, (f_out,), jnp.float32),
            })
    return {"convs": convs, "bns": bns}


def build_adjacency(edge_index, num_nodes):
    # PyG SAGEConv mean aggregation over in-neighbors: A01[i, j] counts edges
    # j -> i; mean = (A01 @ X) / deg_in(i).  The 1/deg is applied in-kernel.
    src, dst = edge_index[0], edge_index[1]
    a01 = jnp.zeros((num_nodes, num_nodes), jnp.float32).at[dst, src].add(1.0)
    deg = a01.sum(axis=1)
    return a01, deg


def net_forward_ref(x, a01, deg, params, eps=1e-5):
    """Pure-JAX reference (matmul operands quantized to bf16 like the kernel;
    adjacency kept exact, 1/deg applied in f32)."""
    q = lambda v: v.astype(jnp.bfloat16).astype(jnp.float32)
    dinv = jnp.where(deg > 0, 1.0 / jnp.maximum(deg, 1.0), 0.0)[:, None]
    h = q(x)
    num_layers = len(params["convs"])
    for li in range(num_layers):
        conv = params["convs"][li]
        agg = (a01 @ h) * dinv
        z = q(agg) @ q(conv["w_l"]) + conv["b_l"] + h @ q(conv["w_r"])
        if li < num_layers - 1:
            bn = params["bns"][li]
            z = (z - bn["running_mean"]) / jnp.sqrt(bn["running_var"] + eps)
            z = z * bn["gamma"] + bn["beta"]
            h = q(jnp.maximum(z, 0.0))
        else:
            return z


if __name__ == "__main__":
    key = jax.random.PRNGKey(0)

    num_nodes = 32
    in_channels, hidden_channels, out_channels, num_layers = 16, 32, 8, 3
    num_edges = 128

    key, kx, ke, kp = jax.random.split(key, 4)
    x = jax.random.normal(kx, (num_nodes, in_channels), jnp.float32)
    edge_index = jax.random.randint(ke, (2, num_edges), 0, num_nodes, jnp.int32)

    params = init_params(kp, in_channels, hidden_channels, out_channels, num_layers)
    a01, deg = build_adjacency(edge_index, num_nodes)

    fwd = jax.jit(lambda xx, aa, dd: net_forward(xx, aa, dd, params))
    out = jax.block_until_ready(fwd(x, a01, deg))

    ref = net_forward_ref(x, a01, deg, params)
    assert out.shape == (num_nodes, out_channels)
    max_err = float(jnp.max(jnp.abs(out - ref)))
    assert jnp.allclose(out, ref, atol=5e-2, rtol=5e-2), f"max abs err {max_err}"

    print("KERNEL_OK")
</pallas_src>

<mosaic_0001>
module attributes {stable_mosaic.version = 11 : i64} {
  func.func @_fused_net_kernel(%arg0: i32, %arg1: i32, %arg2: i32, %arg3: memref<1xi32, #tpu.memory_space<smem>>, %arg4: memref<128x128xi8, #tpu.memory_space<any>>, %arg5: memref<128x128xbf16, #tpu.memory_space<any>>, %arg6: memref<1x128x128xbf16, #tpu.memory_space<vmem>>, %arg7: memref<1x128x128xbf16, #tpu.memory_space<vmem>>, %arg8: memref<1x1x128xf32, #tpu.memory_space<vmem>>, %arg9: memref<1x1x128xf32, #tpu.memory_space<vmem>>, %arg10: memref<128x1xf32, #tpu.memory_space<vmem>>, %arg11: memref<128x128xf32, #tpu.memory_space<vmem>>, %arg12: memref<128x128xi8, #tpu.memory_space<vmem>>, %arg13: memref<128x128xf32, #tpu.memory_space<vmem>>, %arg14: memref<256x128xbf16, #tpu.memory_space<vmem>>, %arg15: memref<2x!tpu.dma_semaphore, #tpu.memory_space<semaphore_mem>>) attributes {dimension_semantics = [#tpu.dimension_semantics<arbitrary>, #tpu.dimension_semantics<arbitrary>, #tpu.dimension_semantics<arbitrary>], iteration_bounds = array<i64: 3, 1, 1>, scalar_prefetch = 1 : i64, scratch_operands = 4 : i64, tpu.core_type = #tpu.core_type<tc>, window_params = [{}, {}, {transform_indices = @transform_2, window_bounds = array<i64: 1, 128, 128>}, {transform_indices = @transform_3, window_bounds = array<i64: 1, 128, 128>}, {transform_indices = @transform_4, window_bounds = array<i64: 1, 1, 128>}, {transform_indices = @transform_5, window_bounds = array<i64: 1, 1, 128>}, {transform_indices = @transform_6, window_bounds = array<i64: 128, 1>}, {transform_indices = @transform_7, window_bounds = array<i64: 128, 128>}]} {
    %c2_i32 = arith.constant 2 : i32
    %c0_i32 = arith.constant 0 : i32
    %0 = arith.cmpi eq, %c2_i32, %c0_i32 : i32
    %c1_i32 = arith.constant 1 : i32
    %1 = arith.select %0, %c1_i32, %c2_i32 : i32
    %2 = arith.remsi %arg0, %1 : i32
    %c0_i32_0 = arith.constant 0 : i32
    %3 = arith.cmpi ne, %2, %c0_i32_0 : i32
    %c0_i32_1 = arith.constant 0 : i32
    %4 = arith.cmpi slt, %2, %c0_i32_1 : i32
    %c0_i32_2 = arith.constant 0 : i32
    %5 = arith.cmpi slt, %1, %c0_i32_2 : i32
    %6 = arith.xori %4, %5 : i1
    %7 = arith.andi %6, %3 : i1
    %8 = arith.addi %2, %1 : i32
    %9 = arith.select %7, %8, %2 : i32
    %c1_i32_3 = arith.constant 1 : i32
    %10 = arith.subi %c1_i32_3, %9 : i32
    %c0_i32_4 = arith.constant 0 : i32
    %11 = arith.cmpi eq, %arg0, %c0_i32_4 : i32
    %c0_i32_5 = arith.constant 0 : i32
    %12 = arith.cmpi eq, %arg1, %c0_i32_5 : i32
    %13 = arith.andi %11, %12 : i1
    %c0_i32_6 = arith.constant 0 : i32
    %14 = arith.cmpi eq, %arg2, %c0_i32_6 : i32
    %15 = arith.andi %13, %14 : i1
    %16 = arith.extui %15 : i1 to i32
    %c0_i32_7 = arith.constant 0 : i32
    %17 = arith.cmpi ne, %16, %c0_i32_7 : i32
    scf.if %17 {
      %c1_i32_15 = arith.constant 1 : i32
      %c128_i32 = arith.constant 128 : i32
      %c0_i32_16 = arith.constant 0 : i32
      %31 = tpu.memref_slice %arg14[%c128_i32, %c0_i32_16] : memref<256x128xbf16, #tpu.memory_space<vmem>> -> memref<128x128xbf16, #tpu.memory_space<vmem>>
      %32 = tpu.memref_slice %arg15[%c1_i32_15] : memref<2x!tpu.dma_semaphore, #tpu.memory_space<semaphore_mem>> -> memref<1x!tpu.dma_semaphore, #tpu.memory_space<semaphore_mem>>
      %33 = tpu.memref_squeeze %32 : memref<1x!tpu.dma_semaphore, #tpu.memory_space<semaphore_mem>> -> memref<!tpu.dma_semaphore, #tpu.memory_space<semaphore_mem>>
      tpu.enqueue_dma source(%arg5 : memref<128x128xbf16, #tpu.memory_space<any>>) target(%31 : memref<128x128xbf16, #tpu.memory_space<vmem>>) target_semaphore(%33 : memref<!tpu.dma_semaphore, #tpu.memory_space<semaphore_mem>>)
      %c0_i32_17 = arith.constant 0 : i32
      %c0_i32_18 = arith.constant 0 : i32
      %c0_i32_19 = arith.constant 0 : i32
      %34 = tpu.memref_slice %arg4[%c0_i32_18, %c0_i32_19] : memref<128x128xi8, #tpu.memory_space<any>> -> memref<128x128xi8, #tpu.memory_space<any>>
      %c0_i32_20 = arith.constant 0 : i32
      %c0_i32_21 = arith.constant 0 : i32
      %35 = tpu.memref_slice %arg12[%c0_i32_20, %c0_i32_21] : memref<128x128xi8, #tpu.memory_space<vmem>> -> memref<128x128xi8, #tpu.memory_space<vmem>>
      %36 = tpu.memref_slice %arg15[%c0_i32_17] : memref<2x!tpu.dma_semaphore, #tpu.memory_space<semaphore_mem>> -> memref<1x!tpu.dma_semaphore, #tpu.memory_space<semaphore_mem>>
      %37 = tpu.memref_squeeze %36 : memref<1x!tpu.dma_semaphore, #tpu.memory_space<semaphore_mem>> -> memref<!tpu.dma_semaphore, #tpu.memory_space<semaphore_mem>>
      tpu.enqueue_dma source(%34 : memref<128x128xi8, #tpu.memory_space<any>>) target(%35 : memref<128x128xi8, #tpu.memory_space<vmem>>) target_semaphore(%37 : memref<!tpu.dma_semaphore, #tpu.memory_space<semaphore_mem>>)
      %c0_i32_22 = arith.constant 0 : i32
      %c0_i32_23 = arith.constant 0 : i32
      %c0_i32_24 = arith.constant 0 : i32
      %38 = tpu.memref_slice %arg4[%c0_i32_23, %c0_i32_24] : memref<128x128xi8, #tpu.memory_space<any>> -> memref<128x128xi8, #tpu.memory_space<any>>
      %c0_i32_25 = arith.constant 0 : i32
      %c0_i32_26 = arith.constant 0 : i32
      %39 = tpu.memref_slice %arg12[%c0_i32_25, %c0_i32_26] : memref<128x128xi8, #tpu.memory_space<vmem>> -> memref<128x128xi8, #tpu.memory_space<vmem>>
      %40 = tpu.memref_slice %arg15[%c0_i32_22] : memref<2x!tpu.dma_semaphore, #tpu.memory_space<semaphore_mem>> -> memref<1x!tpu.dma_semaphore, #tpu.memory_space<semaphore_mem>>
      %41 = tpu.memref_squeeze %40 : memref<1x!tpu.dma_semaphore, #tpu.memory_space<semaphore_mem>> -> memref<!tpu.dma_semaphore, #tpu.memory_space<semaphore_mem>>
      tpu.wait_dma2 semaphore(%41 : memref<!tpu.dma_semaphore, #tpu.memory_space<semaphore_mem>>) src(%38 : memref<128x128xi8, #tpu.memory_space<any>>) dst(%39 : memref<128x128xi8, #tpu.memory_space<vmem>>)
      %c1_i32_27 = arith.constant 1 : i32
      %c128_i32_28 = arith.constant 128 : i32
      %c0_i32_29 = arith.constant 0 : i32
      %42 = tpu.memref_slice %arg14[%c128_i32_28, %c0_i32_29] : memref<256x128xbf16, #tpu.memory_space<vmem>> -> memref<128x128xbf16, #tpu.memory_space<vmem>>
      %43 = tpu.memref_slice %arg15[%c1_i32_27] : memref<2x!tpu.dma_semaphore, #tpu.memory_space<semaphore_mem>> -> memref<1x!tpu.dma_semaphore, #tpu.memory_space<semaphore_mem>>
      %44 = tpu.memref_squeeze %43 : memref<1x!tpu.dma_semaphore, #tpu.memory_space<semaphore_mem>> -> memref<!tpu.dma_semaphore, #tpu.memory_space<semaphore_mem>>
      tpu.wait_dma2 semaphore(%44 : memref<!tpu.dma_semaphore, #tpu.memory_space<semaphore_mem>>) src(%arg5 : memref<128x128xbf16, #tpu.memory_space<any>>) dst(%42 : memref<128x128xbf16, #tpu.memory_space<vmem>>)
    } else {
    }
    %c0_i32_8 = arith.constant 0 : i32
    %18 = arith.cmpi eq, %arg2, %c0_i32_8 : i32
    %19 = arith.extui %18 : i1 to i32
    %c0_i32_9 = arith.constant 0 : i32
    %20 = arith.cmpi ne, %19, %c0_i32_9 : i32
    scf.if %20 {
      %cst = arith.constant 0.000000e+00 : f32
      %31 = vector.broadcast %cst : f32 to vector<128x128xf32>
      %c0 = arith.constant 0 : index
      %c0_15 = arith.constant 0 : index
      %32 = vector.load %arg13[%c0, %c0_15] : memref<128x128xf32, #tpu.memory_space<vmem>>, vector<128x128xf32>
      tpu.vector_store %arg13[%c0, %c0_15], %31 {strides = array<i32>} : memref<128x128xf32, #tpu.memory_space<vmem>>, vector<128x128xf32>,
    } else {
    }
    %c1_i32_10 = arith.constant 1 : i32
    %21 = arith.muli %arg1, %c1_i32_10 : i32
    %22 = arith.addi %21, %arg2 : i32
    %23 = arith.index_cast %22 : i32 to index
    %24 = memref.load %arg3[%23] : memref<1xi32, #tpu.memory_space<smem>>
    %c0_i32_11 = arith.constant 0 : i32
    %25 = arith.cmpi ne, %24, %c0_i32_11 : i32
    %26 = arith.extui %25 : i1 to i32
    %c0_i32_12 = arith.constant 0 : i32
    %27 = arith.cmpi ne, %26, %c0_i32_12 : i32
    scf.if %27 {
      %c128_i32 = arith.constant 128 : i32
      %31 = arith.muli %arg2, %c128_i32 : i32
      %c128_i32_15 = arith.constant 128 : i32
      %32 = arith.muli %arg1, %c128_i32_15 : i32
      %33 = arith.addi %31, %32 : i32
      %34 = tpu.assume_multiple %33, 128 : i32
      %35 = arith.index_cast %34 : i32 to index
      %c0 = arith.constant 0 : index
      %36 = vector.load %arg12[%35, %c0] : memref<128x128xi8, #tpu.memory_space<vmem>>, vector<128x128xi8>
      %c128_i32_16 = arith.constant 128 : i32
      %37 = arith.muli %10, %c128_i32_16 : i32
      %c128_i32_17 = arith.constant 128 : i32
      %38 = arith.muli %arg2, %c128_i32_17 : i32
      %39 = arith.addi %37, %38 : i32
      %40 = tpu.assume_multiple %39, 128 : i32
      %41 = arith.index_cast %40 : i32 to index
      %c0_18 = arith.constant 0 : index
      %42 = vector.load %arg14[%41, %c0_18] : memref<256x128xbf16, #tpu.memory_space<vmem>>, vector<128x128xbf16>
      %c0_19 = arith.constant 0 : index
      %c0_20 = arith.constant 0 : index
      %43 = vector.load %arg13[%c0_19, %c0_20] : memref<128x128xf32, #tpu.memory_space<vmem>>, vector<128x128xf32>
      %44 = arith.sitofp %36 : vector<128x128xi8> to vector<128x128xbf16>
      %cst = arith.constant dense<0.000000e+00> : vector<128x128xf32>
      %45 = tpu.matmul %44, %42, %cst {dimension_numbers = #tpu.dot_dimension_numbers<[1], [0], [0], [1], [0, 0, 1, 1], [], []>} : vector<128x128xbf16>, vector<128x128xbf16>, vector<128x128xf32> -> vector<128x128xf32>
      %46 = arith.addf %43, %45 : vector<128x128xf32>
      %c0_21 = arith.constant 0 : index
      %c0_22 = arith.constant 0 : index
      %47 = vector.load %arg13[%c0_21, %c0_22] : memref<128x128xf32, #tpu.memory_space<vmem>>, vector<128x128xf32>
      tpu.vector_store %arg13[%c0_21, %c0_22], %46 {strides = array<i32>} : memref<128x128xf32, #tpu.memory_space<vmem>>, vector<128x128xf32>,
    } else {
    }
    %c0_i32_13 = arith.constant 0 : i32
    %28 = arith.cmpi eq, %arg2, %c0_i32_13 : i32
    %29 = arith.extui %28 : i1 to i32
    %c0_i32_14 = arith.constant 0 : i32
    %30 = arith.cmpi ne, %29, %c0_i32_14 : i32
    scf.if %30 {
      %c128_i32 = arith.constant 128 : i32
      %31 = arith.muli %10, %c128_i32 : i32
      %c128_i32_15 = arith.constant 128 : i32
      %32 = arith.muli %arg1, %c128_i32_15 : i32
      %33 = arith.addi %31, %32 : i32
      %34 = tpu.assume_multiple %33, 128 : i32
      %35 = arith.index_cast %34 : i32 to index
      %c0 = arith.constant 0 : index
      %36 = vector.load %arg14[%35, %c0] : memref<256x128xbf16, #tpu.memory_space<vmem>>, vector<128x128xbf16>
      %c0_16 = arith.constant 0 : index
      %c0_17 = arith.constant 0 : index
      %37 = vector.load %arg13[%c0_16, %c0_17] : memref<128x128xf32, #tpu.memory_space<vmem>>, vector<128x128xf32>
      %c0_18 = arith.constant 0 : index
      %c0_19 = arith.constant 0 : index
      %38 = vector.load %arg10[%c0_18, %c0_19] : memref<128x1xf32, #tpu.memory_space<vmem>>, vector<128x1xf32>
      %39 = vector.broadcast %38 : vector<128x1xf32> to vector<128x128xf32>
      %40 = arith.mulf %37, %39 : vector<128x128xf32>
      %41 = arith.truncf %40 : vector<128x128xf32> to vector<128x128xbf16>
      %c0_20 = arith.constant 0 : index
      %c0_21 = arith.constant 0 : index
      %c0_22 = arith.constant 0 : index
      %42 = vector.load %arg6[%c0_20, %c0_21, %c0_22] : memref<1x128x128xbf16, #tpu.memory_space<vmem>>, vector<1x128x128xbf16>
      %43 = vector.shape_cast %42 : vector<1x128x128xbf16> to vector<128x128xbf16>
      %cst = arith.constant dense<0.000000e+00> : vector<128x128xf32>
      %44 = tpu.matmul %41, %43, %cst {dimension_numbers = #tpu.dot_dimension_numbers<[1], [0], [0], [1], [0, 0, 1, 1], [], []>} : vector<128x128xbf16>, vector<128x128xbf16>, vector<128x128xf32> -> vector<128x128xf32>
      %c0_23 = arith.constant 0 : index
      %c0_24 = arith.constant 0 : index
      %c0_25 = arith.constant 0 : index
      %45 = vector.load %arg7[%c0_23, %c0_24, %c0_25] : memref<1x128x128xbf16, #tpu.memory_space<vmem>>, vector<1x128x128xbf16>
      %46 = vector.shape_cast %45 : vector<1x128x128xbf16> to vector<128x128xbf16>
      %cst_26 = arith.constant dense<0.000000e+00> : vector<128x128xf32>
      %47 = tpu.matmul %36, %46, %cst_26 {dimension_numbers = #tpu.dot_dimension_numbers<[1], [0], [0], [1], [0, 0, 1, 1], [], []>} : vector<128x128xbf16>, vector<128x128xbf16>, vector<128x128xf32> -> vector<128x128xf32>
      %48 = arith.addf %44, %47 : vector<128x128xf32>
      %c0_27 = arith.constant 0 : index
      %c0_28 = arith.constant 0 : index
      %c0_29 = arith.constant 0 : index
      %49 = vector.load %arg8[%c0_27, %c0_28, %c0_29] : memref<1x1x128xf32, #tpu.memory_space<vmem>>, vector<1x1x128xf32>
      %50 = vector.shape_cast %49 : vector<1x1x128xf32> to vector<1x128xf32>
      %51 = vector.broadcast %50 : vector<1x128xf32> to vector<128x128xf32>
      %52 = arith.mulf %48, %51 : vector<128x128xf32>
      %c0_30 = arith.constant 0 : index
      %c0_31 = arith.constant 0 : index
      %c0_32 = arith.constant 0 : index
      %53 = vector.load %arg9[%c0_30, %c0_31, %c0_32] : memref<1x1x128xf32, #tpu.memory_space<vmem>>, vector<1x1x128xf32>
      %54 = vector.shape_cast %53 : vector<1x1x128xf32> to vector<1x128xf32>
      %55 = vector.broadcast %54 : vector<1x128xf32> to vector<128x128xf32>
      %56 = arith.addf %52, %55 : vector<128x128xf32>
      %c2_i32_33 = arith.constant 2 : i32
      %57 = arith.cmpi eq, %arg0, %c2_i32_33 : i32
      %true = arith.constant true
      %58 = arith.xori %57, %true : i1
      %59 = arith.extui %58 : i1 to i32
      %c0_i32_34 = arith.constant 0 : i32
      %60 = arith.cmpi ne, %59, %c0_i32_34 : i32
      scf.if %60 {
        %c128_i32_36 = arith.constant 128 : i32
        %63 = arith.muli %9, %c128_i32_36 : i32
        %c128_i32_37 = arith.constant 128 : i32
        %64 = arith.muli %arg1, %c128_i32_37 : i32
        %65 = arith.addi %63, %64 : i32
        %66 = tpu.assume_multiple %65, 128 : i32
        %cst_38 = arith.constant 0.000000e+00 : f32
        %67 = vector.broadcast %cst_38 : f32 to vector<128x128xf32>
        %68 = arith.maximumf %56, %67 : vector<128x128xf32>
        %69 = arith.truncf %68 : vector<128x128xf32> to vector<128x128xbf16>
        %70 = arith.index_cast %66 : i32 to index
        %c0_39 = arith.constant 0 : index
        %71 = vector.load %arg14[%70, %c0_39] : memref<256x128xbf16, #tpu.memory_space<vmem>>, vector<128x128xbf16>
        tpu.vector_store %arg14[%70, %c0_39], %69 {strides = array<i32>} : memref<256x128xbf16, #tpu.memory_space<vmem>>, vector<128x128xbf16>,
      } else {
      }
      %61 = arith.extui %57 : i1 to i32
      %c0_i32_35 = arith.constant 0 : i32
      %62 = arith.cmpi ne, %61, %c0_i32_35 : i32
      scf.if %62 {
        %c0_36 = arith.constant 0 : index
        %c0_37 = arith.constant 0 : index
        %63 = vector.load %arg11[%c0_36, %c0_37] : memref<128x128xf32, #tpu.memory_space<vmem>>, vector<128x128xf32>
        tpu.vector_store %arg11[%c0_36, %c0_37], %56 {strides = array<i32>} : memref<128x128xf32, #tpu.memory_space<vmem>>, vector<128x128xf32>,
      } else {
      }
    } else {
    }
    return
  }
  func.func @transform_2(%arg0: i32, %arg1: i32, %arg2: i32, %arg3: memref<1xi32, #tpu.memory_space<smem>>) -> (i32, i32, i32) {
    %c0_i32 = arith.constant 0 : i32
    %c0_i32_0 = arith.constant 0 : i32
    %c0_i32_1 = arith.constant 0 : i32
    return %arg0, %c0_i32, %c0_i32_0 : i32, i32, i32
  }
  func.func @transform_3(%arg0: i32, %arg1: i32, %arg2: i32, %arg3: memref<1xi32, #tpu.memory_space<smem>>) -> (i32, i32, i32) {
    %c0_i32 = arith.constant 0 : i32
    %c0_i32_0 = arith.constant 0 : i32
    %c0_i32_1 = arith.constant 0 : i32
    return %arg0, %c0_i32, %c0_i32_0 : i32, i32, i32
  }
  func.func @transform_4(%arg0: i32, %arg1: i32, %arg2: i32, %arg3: memref<1xi32, #tpu.memory_space<smem>>) -> (i32, i32, i32) {
    %c0_i32 = arith.constant 0 : i32
    %c0_i32_0 = arith.constant 0 : i32
    %c0_i32_1 = arith.constant 0 : i32
    return %arg0, %c0_i32, %c0_i32_0 : i32, i32, i32
  }
  func.func @transform_5(%arg0: i32, %arg1: i32, %arg2: i32, %arg3: memref<1xi32, #tpu.memory_space<smem>>) -> (i32, i32, i32) {
    %c0_i32 = arith.constant 0 : i32
    %c0_i32_0 = arith.constant 0 : i32
    %c0_i32_1 = arith.constant 0 : i32
    return %arg0, %c0_i32, %c0_i32_0 : i32, i32, i32
  }
  func.func @transform_6(%arg0: i32, %arg1: i32, %arg2: i32, %arg3: memref<1xi32, #tpu.memory_space<smem>>) -> (i32, i32) {
    %c0_i32 = arith.constant 0 : i32
    %c0_i32_0 = arith.constant 0 : i32
    return %arg1, %c0_i32 : i32, i32
  }
  func.func @transform_7(%arg0: i32, %arg1: i32, %arg2: i32, %arg3: memref<1xi32, #tpu.memory_space<smem>>) -> (i32, i32) {
    %c0_i32 = arith.constant 0 : i32
    %c0_i32_0 = arith.constant 0 : i32
    return %arg1, %c0_i32 : i32, i32
  }
}

</mosaic_0001>

<llo_original>
// kernel: _lambda_.1
$region0: #{_lambda_.1}
  #allocation0 [shape = 'u32[]', space=smem, size = 0x4, offset = 0x4, fixed_abs, tag = 'smem constant byte address 0x4 - core index']
  #allocation1 [shape = 'u32[144,128]{1,0:T(1,128)}', space=vmem, size = 0x12000, scoped, tag = 'internal scratch']
  #allocation2 [shape = 's8[128,128]{1,0:T(32,128)(4,1)}', space=vmem, size = 0x4000, scoped, tag = 'scratch operand']
  #allocation3 [shape = 'f32[128,128]{1,0:T(8,128)}', space=vmem, size = 0x10000, scoped, tag = 'scratch operand']
  #allocation4 [shape = 'bf16[256,128]{1,0:T(8,128)(2,1)}', space=vmem, size = 0x10000, scoped, tag = 'scratch operand']
  #allocation5 [shape = 's32[2]{0}', space=sflag, size = 0x8, scoped, tag = 'scratch operand']
  #allocation6 [shape = 's32[1]{0}', space=sflag, size = 0x4, scoped, tag = 'scoped memory for _lambda_.1']
  #allocation7 [shape = 's32[1]{0:T(128)S(6)}', space=smem, size = 0x200, scoped, tag = 'prefetched SMEM operand 0']
  #allocation8 [shape = 's32[]', space=sflag, size = 0x4, offset = 0, fixed_abs, tag = 'sflag constant byte address 0x0 - dummy sync flag']
  #allocation9 [shape = 's32[]', space=sflag, size = 0x4, offset = 0, fixed_abs, tag = 'sflag constant byte address 0x0 - dummy sync flag']
  %s0 = inlined_call_operand.<no memory space> [shape: s32[1], index: 0, kind: input, shape index: {}]
  %s1 = inlined_call_operand.vmem [shape: s8[128,128], index: 1, kind: input, shape index: {}]
  %s2 = inlined_call_operand.vmem [shape: bf16[128,128], index: 2, kind: input, shape index: {}]
  %s3 = inlined_call_operand.vmem [shape: bf16[3,128,128], index: 3, kind: input, shape index: {}]
  %s4 = inlined_call_operand.vmem [shape: bf16[3,128,128], index: 4, kind: input, shape index: {}]
  %s5 = inlined_call_operand.vmem [shape: f32[3,1,128], index: 5, kind: input, shape index: {}]
  %s6 = inlined_call_operand.vmem [shape: f32[3,1,128], index: 6, kind: input, shape index: {}]
  %s7 = inlined_call_operand.vmem [shape: f32[128,1], index: 7, kind: input, shape index: {}]
  %s8 = inlined_call_operand.vmem [shape: f32[128,128], index: 8, kind: output, shape index: {}]
  %s9 = sld [smem:[#allocation0]]
  $region145: #{_lambda_.1} parent=0
    _
  %s11 = ssub.s32 1, %s9
  %s12 = scalar_select 0, %s11, %s9
  %13 = sst [smem:[#allocation7]] %s0
  loop: start=0, step=1, limit=5
  $region2: #{_lambda_.1} parent=0 // loop_pre_header
    _
  $region3: #{_lambda_.1} parent=0 // loop_header
    %s15 = sphi 0, %s19
    %p16 = scmp.ge.s32.totalorder %s15, 5
    %s22 = sphi 0, %s41
    %s23 = sphi 0, %s37
    %s24 = sphi 0, %s33
    %s25 = sphi 0, %s22
    %s26 = sphi 0, %s23
    %s27 = sphi 0, %s24
    %s28 = sphi 0, %s25
    %s29 = sphi 0, %s26
    %s30 = sphi 0, %s27
    %s44 = sphi 0, %s46
    %s47 = sphi 0, %s44
    %s48 = sphi 0, %s47
    %s64 = sphi 0, %s48
    %s70 = sphi 0, %s72
    %s73 = sphi 0, %s70
    %s74 = sphi 0, %s73
    %s90 = sphi 0, %s74
    %s96 = sphi 0, %s98
    %s99 = sphi 0, %s96
    %s100 = sphi 0, %s99
    %s116 = sphi 0, %s100
    %s122 = sphi 0, %s124
    %s125 = sphi 0, %s122
    %s126 = sphi 0, %s125
    %s142 = sphi 0, %s126
    %s148 = sphi 0, %s150
    %s151 = sphi 0, %s148
    %s152 = sphi 0, %s151
    %s168 = sphi 0, %s152
    %s174 = sphi 0, %s176
    %s177 = sphi 0, %s174
    %s178 = sphi 0, %s177
    %s194 = sphi 0, %s178
  $region4: #{_lambda_.1} parent=0 // loop_header_branch
    %18 = sbr.rel (%p16) target = $region8
  $region5: #{_lambda_.1} parent=0 // loop_body
    %s20 = ssub.s32 %s15, 1
    %s21 = ssub.s32 %s15, 2
    %s31 = sadd.s32 1, %s24
    %p32 = scmp.ge.s32.totalorder %s31, 1
    %s33 = scalar_select %p32, 0, %s31
    %s34 = sadd.s32 1, %s23
    %s35 = scalar_select %p32, %s34, %s23
    %p36 = scmp.ge.s32.totalorder %s35, 1
    %s37 = scalar_select %p36, 0, %s35
    %s38 = sadd.s32 1, %s22
    %s39 = scalar_select %p36, %s38, %s22
    %p40 = scmp.ge.s32.totalorder %s39, 3
    %s41 = scalar_select %p40, 0, %s39
    %s42 = ssub.s32 %s22, %s41
    %p43 = scmp.eq.s32.totalorder %s42, 0
    %s45 = sadd.s32 %s44, 1
    %s46 = scalar_select %p43, %s44, %s45
    %p49 = pneg %p43
    %p50 = scmp.eq.s32.totalorder %s15, 2
    %p51 = por %p49, %p50
    %p52 = scmp.ne.s32.totalorder %s44, %s47
    %p53 = scmp.eq.s32.totalorder %s15, 0
    %p54 = por %p52, %p53
    %p55 = scmp.ne.s32.totalorder %s44, %s47
    %p56 = scmp.eq.s32.totalorder %s20, 2
    %p57 = por %p55, %p56
    %p58 = scmp.ne.s32.totalorder %s47, %s48
    %p59 = scmp.eq.s32.totalorder %s20, 0
    %p60 = por %p58, %p59
    %p61 = scmp.ne.s32.totalorder %s47, %s48
    %p62 = scmp.eq.s32.totalorder %s21, 2
    %p63 = por %p61, %p62
    %p65 = scmp.ne.s32.totalorder %s48, %s64
    %p66 = scmp.eq.s32.totalorder %s21, 0
    %p67 = por %p65, %p66
    %s68 = ssub.s32 %s22, %s41
    %p69 = scmp.eq.s32.totalorder %s68, 0
    %s71 = sadd.s32 %s70, 1
    %s72 = scalar_select %p69, %s70, %s71
    %p75 = pneg %p69
    %p76 = scmp.eq.s32.totalorder %s15, 2
    %p77 = por %p75, %p76
    %p78 = scmp.ne.s32.totalorder %s70, %s73
    %p79 = scmp.eq.s32.totalorder %s15, 0
    %p80 = por %p78, %p79
    %p81 = scmp.ne.s32.totalorder %s70, %s73
    %p82 = scmp.eq.s32.totalorder %s20, 2
    %p83 = por %p81, %p82
    %p84 = scmp.ne.s32.totalorder %s73, %s74
    %p85 = scmp.eq.s32.totalorder %s20, 0
    %p86 = por %p84, %p85
    %p87 = scmp.ne.s32.totalorder %s73, %s74
    %p88 = scmp.eq.s32.totalorder %s21, 2
    %p89 = por %p87, %p88
    %p91 = scmp.ne.s32.totalorder %s74, %s90
    %p92 = scmp.eq.s32.totalorder %s21, 0
    %p93 = por %p91, %p92
    %s94 = ssub.s32 %s22, %s41
    %p95 = scmp.eq.s32.totalorder %s94, 0
    %s97 = sadd.s32 %s96, 1
    %s98 = scalar_select %p95, %s96, %s97
    %p101 = pneg %p95
    %p102 = scmp.eq.s32.totalorder %s15, 2
    %p103 = por %p101, %p102
    %p104 = scmp.ne.s32.totalorder %s96, %s99
    %p105 = scmp.eq.s32.totalorder %s15, 0
    %p106 = por %p104, %p105
    %p107 = scmp.ne.s32.totalorder %s96, %s99
    %p108 = scmp.eq.s32.totalorder %s20, 2
    %p109 = por %p107, %p108
    %p110 = scmp.ne.s32.totalorder %s99, %s100
    %p111 = scmp.eq.s32.totalorder %s20, 0
    %p112 = por %p110, %p111
    %p113 = scmp.ne.s32.totalorder %s99, %s100
    %p114 = scmp.eq.s32.totalorder %s21, 2
    %p115 = por %p113, %p114
    %p117 = scmp.ne.s32.totalorder %s100, %s116
    %p118 = scmp.eq.s32.totalorder %s21, 0
    %p119 = por %p117, %p118
    %s120 = ssub.s32 %s22, %s41
    %p121 = scmp.eq.s32.totalorder %s120, 0
    %s123 = sadd.s32 %s122, 1
    %s124 = scalar_select %p121, %s122, %s123
    %p127 = pneg %p121
    %p128 = scmp.eq.s32.totalorder %s15, 2
    %p129 = por %p127, %p128
    %p130 = scmp.ne.s32.totalorder %s122, %s125
    %p131 = scmp.eq.s32.totalorder %s15, 0
    %p132 = por %p130, %p131
    %p133 = scmp.ne.s32.totalorder %s122, %s125
    %p134 = scmp.eq.s32.totalorder %s20, 2
    %p135 = por %p133, %p134
    %p136 = scmp.ne.s32.totalorder %s125, %s126
    %p137 = scmp.eq.s32.totalorder %s20, 0
    %p138 = por %p136, %p137
    %p139 = scmp.ne.s32.totalorder %s125, %s126
    %p140 = scmp.eq.s32.totalorder %s21, 2
    %p141 = por %p139, %p140
    %p143 = scmp.ne.s32.totalorder %s126, %s142
    %p144 = scmp.eq.s32.totalorder %s21, 0
    %p145 = por %p143, %p144
    %s146 = ssub.s32 %s23, %s37
    %p147 = scmp.eq.s32.totalorder %s146, 0
    %s149 = sadd.s32 %s148, 1
    %s150 = scalar_select %p147, %s148, %s149
    %p153 = pneg %p147
    %p154 = scmp.eq.s32.totalorder %s15, 2
    %p155 = por %p153, %p154
    %p156 = scmp.ne.s32.totalorder %s148, %s151
    %p157 = scmp.eq.s32.totalorder %s15, 0
    %p158 = por %p156, %p157
    %p159 = scmp.ne.s32.totalorder %s148, %s151
    %p160 = scmp.eq.s32.totalorder %s20, 2
    %p161 = por %p159, %p160
    %p162 = scmp.ne.s32.totalorder %s151, %s152
    %p163 = scmp.eq.s32.totalorder %s20, 0
    %p164 = por %p162, %p163
    %p165 = scmp.ne.s32.totalorder %s151, %s152
    %p166 = scmp.eq.s32.totalorder %s21, 2
    %p167 = por %p165, %p166
    %p169 = scmp.ne.s32.totalorder %s152, %s168
    %p170 = scmp.eq.s32.totalorder %s21, 0
    %p171 = por %p169, %p170
    %s172 = ssub.s32 %s23, %s37
    %p173 = scmp.eq.s32.totalorder %s172, 0
    %s175 = sadd.s32 %s174, 1
    %s176 = scalar_select %p173, %s174, %s175
    %p179 = pneg %p173
    %p180 = scmp.eq.s32.totalorder %s15, 2
    %p181 = por %p179, %p180
    %p182 = scmp.ne.s32.totalorder %s174, %s177
    %p183 = scmp.eq.s32.totalorder %s15, 0
    %p184 = por %p182, %p183
    %p185 = scmp.ne.s32.totalorder %s174, %s177
    %p186 = scmp.eq.s32.totalorder %s20, 2
    %p187 = por %p185, %p186
    %p188 = scmp.ne.s32.totalorder %s177, %s178
    %p189 = scmp.eq.s32.totalorder %s20, 0
    %p190 = por %p188, %p189
    %p191 = scmp.ne.s32.totalorder %s177, %s178
    %p192 = scmp.eq.s32.totalorder %s21, 2
    %p193 = por %p191, %p192
    %p195 = scmp.ne.s32.totalorder %s178, %s194
    %p196 = scmp.eq.s32.totalorder %s21, 0
    %p197 = por %p195, %p196
    %p198 = scmp.le.s32.totalorder 1, %s15
    %p199 = scmp.lt.s32.totalorder %s15, 4
    %p200 = pnand %p198, %p199
    %p201 = pneg %p200
    // Predicated region
    $region9: #{_lambda_.1} parent=5 // pred_check
      _
    $region10: #{_lambda_.1} parent=5 // pred_check_branch
      %203 = sbr.rel (%p200) target = $region12
    $region11: #{_lambda_.1} parent=5 // pred_region
      %s204 = ssub.s32 %s15, 1
      // Predicated region
      $region13: #{_lambda_.1} parent=11 // pred_check
        %p205 = pneg %p164
      $region14: #{_lambda_.1} parent=11 // pred_check_branch
        %207 = sbr.rel (%p205) target = $region16
      $region15: #{_lambda_.1} parent=11 // pred_region
        %s208 = smul.u32 16, %s26
        %p209 = scmp.lt.s32.totalorder %s208, 15
        %s210 = scalar_select %p209, %s208, 15
        %s211 = smul.addr %s210, 8
        %s212 = scalar_lea.vmem %s7, %s211
        %s213 = smul.u32 16, %s26
      $region16: #{_lambda_.1} parent=11 // pred_fallthru
        _
    $region12: #{_lambda_.1} parent=5 // pred_fallthru
      _
    %p214 = scmp.lt.s32.totalorder %s15, 3
    // Predicated region
    $region17: #{_lambda_.1} parent=5 // pred_check
      %p215 = pneg %p214
    $region18: #{_lambda_.1} parent=5 // pred_check_branch
      %217 = sbr.rel (%p215) target = $region20
    $region19: #{_lambda_.1} parent=5 // pred_region
      // Predicated region
      $region21: #{_lambda_.1} parent=19 // pred_check
        %p218 = pneg %p54
      $region22: #{_lambda_.1} parent=19 // pred_check_branch
        %220 = sbr.rel (%p218) target = $region24
      $region23: #{_lambda_.1} parent=19 // pred_region
        %p221 = scmp.lt.s32.totalorder %s22, 2
        %s222 = scalar_select %p221, %s22, 2
        %s223 = smul.addr %s222, 16
        %s224 = smul.addr %s223, 4
        %s225 = scalar_lea.vmem %s3, %s224
      $region24: #{_lambda_.1} parent=19 // pred_fallthru
        _
      // Predicated region
      $region25: #{_lambda_.1} parent=19 // pred_check
        %p226 = pneg %p80
      $region26: #{_lambda_.1} parent=19 // pred_check_branch
        %228 = sbr.rel (%p226) target = $region28
      $region27: #{_lambda_.1} parent=19 // pred_region
        %p229 = scmp.lt.s32.totalorder %s22, 2
        %s230 = scalar_select %p229, %s22, 2
        %s231 = smul.addr %s230, 16
        %s232 = smul.addr %s231, 4
        %s233 = scalar_lea.vmem %s4, %s232
      $region28: #{_lambda_.1} parent=19 // pred_fallthru
        _
      // Predicated region
      $region29: #{_lambda_.1} parent=19 // pred_check
        %p234 = pneg %p106
      $region30: #{_lambda_.1} parent=19 // pred_check_branch
        %236 = sbr.rel (%p234) target = $region32
      $region31: #{_lambda_.1} parent=19 // pred_region
        %p237 = scmp.lt.s32.totalorder %s22, 2
        %s238 = scalar_select %p237, %s22, 2
        %s239 = scalar_lea.vmem %s5, %s238
      $region32: #{_lambda_.1} parent=19 // pred_fallthru
        _
      // Predicated region
      $region33: #{_lambda_.1} parent=19 // pred_check
        %p240 = pneg %p132
      $region34: #{_lambda_.1} parent=19 // pred_check_branch
        %242 = sbr.rel (%p240) target = $region36
      $region35: #{_lambda_.1} parent=19 // pred_region
        %p243 = scmp.lt.s32.totalorder %s22, 2
        %s244 = scalar_select %p243, %s22, 2
        %s245 = scalar_lea.vmem %s6, %s244
      $region36: #{_lambda_.1} parent=19 // pred_fallthru
        _
    $region20: #{_lambda_.1} parent=5 // pred_fallthru
      _
    %p246 = scmp.le.s32.totalorder 1, %s15
    %p247 = scmp.lt.s32.totalorder %s15, 4
    %p248 = pnand %p246, %p247
    %p249 = pneg %p248
    // Predicated region
    $region37: #{_lambda_.1} parent=5 // pred_check
      _
    $region38: #{_lambda_.1} parent=5 // pred_check_branch
      %251 = sbr.rel (%p248) target = $region40
    $region39: #{_lambda_.1} parent=5 // pred_region
      %s252 = ssub.s32 %s15, 1
      %p253 = scmp.lt.s32.totalorder %s25, 2
      %s254 = scalar_select %p253, %s25, 2
      %s255 = smul.addr %s254, 16
      %s256 = smul.addr %s255, 4
      %s257 = scalar_lea.vmem %s3, %s256
      %p258 = pneg %p60
      %p259 = pneg %p57
      %p260 = scmp.lt.s32.totalorder %s25, 2
      %s261 = scalar_select %p260, %s25, 2
      %s262 = smul.addr %s261, 16
      %s263 = smul.addr %s262, 4
      %s264 = scalar_lea.vmem %s4, %s263
      %p265 = pneg %p86
      %p266 = pneg %p83
      %p267 = scmp.lt.s32.totalorder %s25, 2
      %s268 = scalar_select %p267, %s25, 2
      %s269 = scalar_lea.vmem %s5, %s268
      %p270 = pneg %p112
      %p271 = pneg %p109
      %p272 = scmp.lt.s32.totalorder %s25, 2
      %s273 = scalar_select %p272, %s25, 2
      %s274 = scalar_lea.vmem %s6, %s273
      %p275 = pneg %p138
      %p276 = pneg %p135
      %s277 = smul.u32 16, %s26
      %p278 = scmp.lt.s32.totalorder %s277, 15
      %s279 = scalar_select %p278, %s277, 15
      %s280 = smul.addr %s279, 8
      %s281 = scalar_lea.vmem %s7, %s280
      %p282 = pneg %p164
      %p283 = pneg %p161
      %p284 = pneg %p190
      %p285 = pneg %p187
      %s286 = smul.u32 16, %s26
      %p287 = scmp.lt.s32.totalorder %s286, 15
      %s288 = scalar_select %p287, %s286, 15
      %s289 = smul.addr %s288, 8
      %s290 = scalar_lea.vmem %s8, %s289
      %p291 = scmp.lt.s32.totalorder %s25, 2
      %s292 = scalar_select %p291, %s25, 2
      %s293 = smul.addr %s292, 16
      %s294 = smul.addr %s293, 4
      %s295 = scalar_lea.vmem %s3, %s294
      %p296 = scmp.lt.s32.totalorder %s25, 2
      %s297 = scalar_select %p296, %s25, 2
      %s298 = smul.addr %s297, 16
      %s299 = smul.addr %s298, 4
      %s300 = scalar_lea.vmem %s4, %s299
      %p301 = scmp.lt.s32.totalorder %s25, 2
      %s302 = scalar_select %p301, %s25, 2
      %s303 = scalar_lea.vmem %s5, %s302
      %p304 = scmp.lt.s32.totalorder %s25, 2
      %s305 = scalar_select %p304, %s25, 2
      %s306 = scalar_lea.vmem %s6, %s305
      %s307 = smul.u32 16, %s26
      %p308 = scmp.lt.s32.totalorder %s307, 15
      %s309 = scalar_select %p308, %s307, 15
      %s310 = smul.addr %s309, 8
      %s311 = scalar_lea.vmem %s7, %s310
      %s312 = smul.u32 16, %s26
      %s313 = smul.u32 16, %s26
      %p314 = scmp.lt.s32.totalorder %s313, 15
      %s315 = scalar_select %p314, %s313, 15
      %s316 = smul.addr %s315, 8
      %s317 = scalar_lea.vmem %s8, %s316
      %s318 = smul.u32 16, %s26
      %p320 = scmp.lt.s32.totalorder %s25, 0
      %s321 = ssub.s32 0, %s25
      %s322 = scalar_select %p320, %s321, %s25
      %s323 = sand.u32 %s322, 1
      %s324 = ssub.s32 0, %s323
      %s325 = scalar_select %p320, %s324, %s323
      %p326 = scmp.ne.s32.totalorder %s325, 0
      %p327 = scmp.lt.s32.totalorder %s325, 0
      %p328 = pnand %p327, %p326
      %p329 = pneg %p328
      %s330 = sadd.s32 %s325, 2
      %s331 = scalar_select %p329, %s330, %s325
      %s332 = ssub.s32 1, %s331
      %p333 = scmp.eq.s32.totalorder %s25, 0
      %p334 = scmp.eq.s32.totalorder %s26, 0
      %p335 = pnand %p333, %p334
      %p336 = pneg %p335
      %p337 = scmp.eq.s32.totalorder %s27, 0
      %p338 = pnand %p336, %p337
      %p339 = pneg %p338
      // Predicated region
      $region41: #{_lambda_.1} parent=39 // pred_check
        _
      $region42: #{_lambda_.1} parent=39 // pred_check_branch
        %341 = sbr.rel (%p338) target = $region44
      $region43: #{_lambda_.1} parent=39 // pred_region
        %s342 = scalar_lea.vmem [#allocation4], 64
        %s343 = scalar_lea.sflag [#allocation5], 1
        %p345 = scmp.lt.u32.totalorder 64, 8
        %p346 = pneg %p345
        // Predicated region
        $region45: #{_lambda_.1} parent=43 // pred_check
          _
        $region46: #{_lambda_.1} parent=43 // pred_check_branch
          %348 = sbr.rel (%p345) target = $region48
        $region47: #{_lambda_.1} parent=43 // pred_region
          %s364 = sand.u32 64, 7
          %p365 = scmp.eq.s32.totalorder %s364, 0
          // Predicated region
          $region60: #{_lambda_.1} parent=47 // pred_check
            %p366 = pneg %p365
          $region61: #{_lambda_.1} parent=47 // pred_check_branch
            %368 = sbr.rel (%p366) target = $region63
          $region62: #{_lambda_.1} parent=47 // pred_region
            loop: start=0, step=1, limit=1
            $region64: #{_lambda_.1} parent=62 // loop_pre_header
              _
            $region65: #{_lambda_.1} parent=62 // loop_header
              %s370 = sphi 0, %s374
              %p371 = scmp.ge.s32.totalorder %s370, 1
              %s375 = sphi %s2, %s2
              %s376 = sphi %s342, %s342
            $region66: #{_lambda_.1} parent=62 // loop_header_branch
              %373 = sbr.rel (%p371) target = $region70
            $region67: #{_lambda_.1} parent=62 // loop_body
              %v377 = vld [vmem:[%s375] sm:$0xff]
              %378 = vst [vmem:[%s376] sm:$0xff] %v377
              %v379 = vld [vmem:[%s375 + $0x8] sm:$0xff]
              %380 = vst [vmem:[%s376 + $0x8] sm:$0xff] %v379
              %v381 = vld [vmem:[%s375 + $0x10] sm:$0xff]
              %382 = vst [vmem:[%s376 + $0x10] sm:$0xff] %v381
              %v383 = vld [vmem:[%s375 + $0x18] sm:$0xff]
              %384 = vst [vmem:[%s376 + $0x18] sm:$0xff] %v383
              %v385 = vld [vmem:[%s375 + $0x20] sm:$0xff]
              %386 = vst [vmem:[%s376 + $0x20] sm:$0xff] %v385
              %v387 = vld [vmem:[%s375 + $0x28] sm:$0xff]
              %388 = vst [vmem:[%s376 + $0x28] sm:$0xff] %v387
              %v389 = vld [vmem:[%s375 + $0x30] sm:$0xff]
              %390 = vst [vmem:[%s376 + $0x30] sm:$0xff] %v389
              %v391 = vld [vmem:[%s375 + $0x38] sm:$0xff]
              %392 = vst [vmem:[%s376 + $0x38] sm:$0xff] %v391
            $region68: #{_lambda_.1} parent=62 // loop_footer
              %s374 = sadd.s32 1, %s370
            $region69: #{_lambda_.1} parent=62 // loop_footer_branch
              %369 = sbr.rel target = $region65
            $region70: #{_lambda_.1} parent=62 // loop_exit
              _
          $region63: #{_lambda_.1} parent=47 // pred_fallthru
            _
          %p393 = pneg %p365
          // Predicated region
          $region71: #{_lambda_.1} parent=47 // pred_check
            _
          $region72: #{_lambda_.1} parent=47 // pred_check_branch
            %395 = sbr.rel (%p365) target = $region74
          $region73: #{_lambda_.1} parent=47 // pred_region
            %s396 = sand.u32 64, 7
          $region74: #{_lambda_.1} parent=47 // pred_fallthru
            _
        $region48: #{_lambda_.1} parent=43 // pred_fallthru
          _
        // Predicated region
        $region49: #{_lambda_.1} parent=43 // pred_check
          %p349 = pneg %p345
        $region50: #{_lambda_.1} parent=43 // pred_check_branch
          %351 = sbr.rel (%p349) target = $region52
        $region51: #{_lambda_.1} parent=43 // pred_region
          %s352 = sshll.u32 1, 64
          %s353 = ssub.s32 %s352, 1
          loop: start=0, step=1, limit=1
          $region53: #{_lambda_.1} parent=51 // loop_pre_header
            _
          $region54: #{_lambda_.1} parent=51 // loop_header
            %s355 = sphi 0, %s359
            %p356 = scmp.ge.s32.totalorder %s355, 1
            %s360 = sphi %s2, %s2
            %s361 = sphi %s342, %s342
          $region55: #{_lambda_.1} parent=51 // loop_header_branch
            %358 = sbr.rel (%p356) target = $region59
          $region56: #{_lambda_.1} parent=51 // loop_body
            %v362 = vld [vmem:[%s360] sm:%s353]
            %363 = vst [vmem:[%s361] sm:%s353] %v362
          $region57: #{_lambda_.1} parent=51 // loop_footer
            %s359 = sadd.s32 1, %s355
          $region58: #{_lambda_.1} parent=51 // loop_footer_branch
            %354 = sbr.rel target = $region54
          $region59: #{_lambda_.1} parent=51 // loop_exit
            _
        $region52: #{_lambda_.1} parent=43 // pred_fallthru
          _
        // Predicated region
        $region75: #{_lambda_.1} parent=43 // pred_check
          _
        $region76: #{_lambda_.1} parent=43 // pred_check_branch
          %399 = sbr.rel (0) target = $region78
        $region77: #{_lambda_.1} parent=43 // pred_region
          %400 = vsyncadd %s343, 1024
        $region78: #{_lambda_.1} parent=43 // pred_fallthru
          _
        %p402 = scmp.lt.u32.totalorder 32, 8
        %p403 = pneg %p402
        // Predicated region
        $region79: #{_lambda_.1} parent=43 // pred_check
          _
        $region80: #{_lambda_.1} parent=43 // pred_check_branch
          %405 = sbr.rel (%p402) target = $region82
        $region81: #{_lambda_.1} parent=43 // pred_region
          %s421 = sand.u32 32, 7
          %p422 = scmp.eq.s32.totalorder %s421, 0
          // Predicated region
          $region94: #{_lambda_.1} parent=81 // pred_check
            %p423 = pneg %p422
          $region95: #{_lambda_.1} parent=81 // pred_check_branch
            %425 = sbr.rel (%p423) target = $region97
          $region96: #{_lambda_.1} parent=81 // pred_region
            loop: start=0, step=1, limit=1
            $region98: #{_lambda_.1} parent=96 // loop_pre_header
              _
            $region99: #{_lambda_.1} parent=96 // loop_header
              %s427 = sphi 0, %s431
              %p428 = scmp.ge.s32.totalorder %s427, 1
              %s432 = sphi %s1, %s1
              %s433 = sphi [#allocation2], [#allocation2]
            $region100: #{_lambda_.1} parent=96 // loop_header_branch
              %430 = sbr.rel (%p428) target = $region104
            $region101: #{_lambda_.1} parent=96 // loop_body
              %v434 = vld [vmem:[%s432] sm:$0xff]
              %435 = vst [vmem:[%s433] sm:$0xff] %v434
              %v436 = vld [vmem:[%s432 + $0x8] sm:$0xff]
              %437 = vst [vmem:[%s433 + $0x8] sm:$0xff] %v436
              %v438 = vld [vmem:[%s432 + $0x10] sm:$0xff]
              %439 = vst [vmem:[%s433 + $0x10] sm:$0xff] %v438
              %v440 = vld [vmem:[%s432 + $0x18] sm:$0xff]
              %441 = vst [vmem:[%s433 + $0x18] sm:$0xff] %v440
            $region102: #{_lambda_.1} parent=96 // loop_footer
              %s431 = sadd.s32 1, %s427
            $region103: #{_lambda_.1} parent=96 // loop_footer_branch
              %426 = sbr.rel target = $region99
            $region104: #{_lambda_.1} parent=96 // loop_exit
              _
          $region97: #{_lambda_.1} parent=81 // pred_fallthru
            _
          %p442 = pneg %p422
          // Predicated region
          $region105: #{_lambda_.1} parent=81 // pred_check
            _
          $region106: #{_lambda_.1} parent=81 // pred_check_branch
            %444 = sbr.rel (%p422) target = $region108
          $region107: #{_lambda_.1} parent=81 // pred_region
            %s445 = sand.u32 32, 7
          $region108: #{_lambda_.1} parent=81 // pred_fallthru
            _
        $region82: #{_lambda_.1} parent=43 // pred_fallthru
          _
        // Predicated region
        $region83: #{_lambda_.1} parent=43 // pred_check
          %p406 = pneg %p402
        $region84: #{_lambda_.1} parent=43 // pred_check_branch
          %408 = sbr.rel (%p406) target = $region86
        $region85: #{_lambda_.1} parent=43 // pred_region
          %s409 = sshll.u32 1, 32
          %s410 = ssub.s32 %s409, 1
          loop: start=0, step=1, limit=1
          $region87: #{_lambda_.1} parent=85 // loop_pre_header
            _
          $region88: #{_lambda_.1} parent=85 // loop_header
            %s412 = sphi 0, %s416
            %p413 = scmp.ge.s32.totalorder %s412, 1
            %s417 = sphi %s1, %s1
            %s418 = sphi [#allocation2], [#allocation2]
          $region89: #{_lambda_.1} parent=85 // loop_header_branch
            %415 = sbr.rel (%p413) target = $region93
          $region90: #{_lambda_.1} parent=85 // loop_body
            %v419 = vld [vmem:[%s417] sm:%s410]
            %420 = vst [vmem:[%s418] sm:%s410] %v419
          $region91: #{_lambda_.1} parent=85 // loop_footer
            %s416 = sadd.s32 1, %s412
          $region92: #{_lambda_.1} parent=85 // loop_footer_branch
            %411 = sbr.rel target = $region88
          $region93: #{_lambda_.1} parent=85 // loop_exit
            _
        $region86: #{_lambda_.1} parent=43 // pred_fallthru
          _
        // Predicated region
        $region109: #{_lambda_.1} parent=43 // pred_check
          _
        $region110: #{_lambda_.1} parent=43 // pred_check_branch
          %448 = sbr.rel (0) target = $region112
        $region111: #{_lambda_.1} parent=43 // pred_region
          %449 = vsyncadd [#allocation5], 512
        $region112: #{_lambda_.1} parent=43 // pred_fallthru
          _
        %s450 = smul.u32 2, 16
        %s451 = smul.u32 %s450, 1
        %s452 = sshll.u32 %s451, 4
        %453 = dma.done [#allocation5], %s452
        %s454 = smul.u32 4, 16
        %s455 = smul.u32 %s454, 1
        %s456 = sshll.u32 %s455, 4
        %457 = dma.done %s343, %s456
      $region44: #{_lambda_.1} parent=39 // pred_fallthru
        _
      // Predicated region
      $region113: #{_lambda_.1} parent=39 // pred_check
        %p458 = pneg %p337
      $region114: #{_lambda_.1} parent=39 // pred_check_branch
        %460 = sbr.rel (%p458) target = $region116
      $region115: #{_lambda_.1} parent=39 // pred_region
        %461 = vst [vmem:[#allocation3] sm:$0xff] 0.0
        %462 = vst [vmem:[#allocation3 + $0x8] sm:$0xff] 0.0
        %463 = vst [vmem:[#allocation3 + $0x10] sm:$0xff] 0.0
        %464 = vst [vmem:[#allocation3 + $0x18] sm:$0xff] 0.0
        %465 = vst [vmem:[#allocation3 + $0x20] sm:$0xff] 0.0
        %466 = vst [vmem:[#allocation3 + $0x28] sm:$0xff] 0.0
        %467 = vst [vmem:[#allocation3 + $0x30] sm:$0xff] 0.0
        %468 = vst [vmem:[#allocation3 + $0x38] sm:$0xff] 0.0
        %469 = vst [vmem:[#allocation3 + $0x40] sm:$0xff] 0.0
        %470 = vst [vmem:[#allocation3 + $0x48] sm:$0xff] 0.0
        %471 = vst [vmem:[#allocation3 + $0x50] sm:$0xff] 0.0
        %472 = vst [vmem:[#allocation3 + $0x58] sm:$0xff] 0.0
        %473 = vst [vmem:[#allocation3 + $0x60] sm:$0xff] 0.0
        %474 = vst [vmem:[#allocation3 + $0x68] sm:$0xff] 0.0
        %475 = vst [vmem:[#allocation3 + $0x70] sm:$0xff] 0.0
        %476 = vst [vmem:[#allocation3 + $0x78] sm:$0xff] 0.0
      $region116: #{_lambda_.1} parent=39 // pred_fallthru
        _
      %s477 = sadd.s32 %s26, %s27
      %s478 = sld [smem:[#allocation7 + %s477]]
      %p479 = scmp.ne.s32.totalorder %s478, 0
      // Predicated region
      $region117: #{_lambda_.1} parent=39 // pred_check
        %p480 = pneg %p479
      $region118: #{_lambda_.1} parent=39 // pred_check_branch
        %482 = sbr.rel (%p480) target = $region120
      $region119: #{_lambda_.1} parent=39 // pred_region
        %s483 = smul.u32 %s27, 128
        %s484 = smul.u32 %s26, 128
        %s485 = sadd.s32 %s483, %s484
        %s486 = sshra.s32 %s485, 5
        %s487 = sand.u32 %s485, 31
        %s488 = smul.addr %s486, 8
        %s489 = scalar_lea.vmem [#allocation2], %s488
        %v490 = vld [vmem:[%s489] sm:$0xff]
        %v491 = vld [vmem:[%s489 + $0x8] sm:$0xff]
        %v492 = vld [vmem:[%s489 + $0x10] sm:$0xff]
        %v493 = vld [vmem:[%s489 + $0x18] sm:$0xff]
        %s494 = smul.u32 %s332, 128
        %s495 = sadd.s32 %s494, %s483
        %s496 = sshra.s32 %s495, 3
        %s497 = sand.u32 %s495, 7
        %s498 = smul.addr %s496, 4
        %s499 = scalar_lea.vmem [#allocation4], %s498
        %v500 = vld [vmem:[%s499] sm:$0xf]
        %v501 = vld [vmem:[%s499 + $0x4] sm:$0xf]
        %v502 = vld [vmem:[%s499 + $0x8] sm:$0xf]
        %v503 = vld [vmem:[%s499 + $0xc] sm:$0xf]
        %v504 = vld [vmem:[%s499 + $0x10] sm:$0xf]
        %v505 = vld [vmem:[%s499 + $0x14] sm:$0xf]
        %v506 = vld [vmem:[%s499 + $0x18] sm:$0xf]
        %v507 = vld [vmem:[%s499 + $0x1c] sm:$0xf]
        %v508 = vld [vmem:[%s499 + $0x20] sm:$0xf]
        %v509 = vld [vmem:[%s499 + $0x24] sm:$0xf]
        %v510 = vld [vmem:[%s499 + $0x28] sm:$0xf]
        %v511 = vld [vmem:[%s499 + $0x2c] sm:$0xf]
        %v512 = vld [vmem:[%s499 + $0x30] sm:$0xf]
        %v513 = vld [vmem:[%s499 + $0x34] sm:$0xf]
        %v514 = vld [vmem:[%s499 + $0x38] sm:$0xf]
        %v515 = vld [vmem:[%s499 + $0x3c] sm:$0xf]
        %v516 = vld [vmem:[#allocation3] sm:$0xff]
        %v517 = vld [vmem:[#allocation3 + $0x8] sm:$0xff]
        %v518 = vld [vmem:[#allocation3 + $0x10] sm:$0xff]
        %v519 = vld [vmem:[#allocation3 + $0x18] sm:$0xff]
        %v520 = vld [vmem:[#allocation3 + $0x20] sm:$0xff]
        %v521 = vld [vmem:[#allocation3 + $0x28] sm:$0xff]
        %v522 = vld [vmem:[#allocation3 + $0x30] sm:$0xff]
        %v523 = vld [vmem:[#allocation3 + $0x38] sm:$0xff]
        %v524 = vld [vmem:[#allocation3 + $0x40] sm:$0xff]
        %v525 = vld [vmem:[#allocation3 + $0x48] sm:$0xff]
        %v526 = vld [vmem:[#allocation3 + $0x50] sm:$0xff]
        %v527 = vld [vmem:[#allocation3 + $0x58] sm:$0xff]
        %v528 = vld [vmem:[#allocation3 + $0x60] sm:$0xff]
        %v529 = vld [vmem:[#allocation3 + $0x68] sm:$0xff]
        %v530 = vld [vmem:[#allocation3 + $0x70] sm:$0xff]
        %v531 = vld [vmem:[#allocation3 + $0x78] sm:$0xff]
        %v532 = vunpack.c.l.s8.bf16 %v490
        %v533 = vunpack.c.h.s8.bf16 %v490
        %v534 = vunpack.c.l.s8.bf16 %v491
        %v535 = vunpack.c.h.s8.bf16 %v491
        %v536 = vunpack.c.l.s8.bf16 %v492
        %v537 = vunpack.c.h.s8.bf16 %v492
        %v538 = vunpack.c.l.s8.bf16 %v493
        %v539 = vunpack.c.h.s8.bf16 %v493
        %v556 = vunpack.c.l.b16 %v500
        %v557 = vunpack.c.l.b16 %v501
        %v558 = vunpack.c.l.b16 %v502
        %v559 = vunpack.c.l.b16 %v503
        %v560 = vunpack.c.l.b16 %v504
        %v561 = vunpack.c.l.b16 %v505
        %v562 = vunpack.c.l.b16 %v506
        %v563 = vunpack.c.l.b16 %v507
        %v564 = vunpack.c.l.b16 %v508
        %v565 = vunpack.c.l.b16 %v509
        %v566 = vunpack.c.l.b16 %v510
        %v567 = vunpack.c.l.b16 %v511
        %v568 = vunpack.c.l.b16 %v512
        %v569 = vunpack.c.l.b16 %v513
        %v570 = vunpack.c.l.b16 %v514
        %v571 = vunpack.c.l.b16 %v515
        %v572 = vpack.c.b16 %v557, %v556
        %v573 = vpack.c.b16 %v559, %v558
        %v574 = vpack.c.b16 %v561, %v560
        %v575 = vpack.c.b16 %v563, %v562
        %v576 = vpack.c.b16 %v565, %v564
        %v577 = vpack.c.b16 %v567, %v566
        %v578 = vpack.c.b16 %v569, %v568
        %v579 = vpack.c.b16 %v571, %v570
        %588 = vmatprep.subr.bf16.mxu0 0
        %589 = vmatpush1.bf16.msra.mxu0 %v579
        %590 = vmatprep.subr.bf16.mxu0 0
        %591 = vmatpush1.bf16.msra.mxu0 %v578
        %592 = vmatprep.subr.bf16.mxu0 0
        %593 = vmatpush1.bf16.msra.mxu0 %v577
        %594 = vmatprep.subr.bf16.mxu0 0
        %595 = vmatpush1.bf16.msra.mxu0 %v576
        %596 = vmatprep.subr.bf16.mxu0 0
        %597 = vmatpush1.bf16.msra.mxu0 %v575
        %598 = vmatprep.subr.bf16.mxu0 0
        %599 = vmatpush1.bf16.msra.mxu0 %v574
        %600 = vmatprep.subr.bf16.mxu0 0
        %601 = vmatpush1.bf16.msra.mxu0 %v573
        %602 = vmatprep.subr.bf16.mxu0 0
        %603 = vmatpush1.bf16.msra.mxu0 %v572
        %604 = vmatprep.subr.bf16.mxu0 0
        %605 = vmatpush2.bf16.msra.mxu0 0
        %606 = vmatprep.subr.bf16.mxu0 0
        %607 = vmatpush2.bf16.msra.mxu0 0
        %608 = vmatprep.subr.bf16.mxu0 0
        %609 = vmatpush2.bf16.msra.mxu0 0
        %610 = vmatprep.subr.bf16.mxu0 0
        %611 = vmatpush2.bf16.msra.mxu0 0
        %612 = vmatprep.subr.bf16.mxu0 0
        %613 = vmatpush2.bf16.msra.mxu0 0
        %614 = vmatprep.subr.bf16.mxu0 0
        %615 = vmatpush2.bf16.msra.mxu0 0
        %616 = vmatprep.subr.bf16.mxu0 0
        %617 = vmatpush2.bf16.msra.mxu0 0
        %618 = vmatprep.subr.bf16.mxu0 0
        %619 = vmatpush2.bf16.msra.mxu0 0
        %620 = vmatprep.mubr.bf16.mxu0 0
        %621 = vmatmul.mubr.bf16.gmra.mxu0 %v532
        %v622 = vpop.f32.mrf.mxu0
        %v623 = vadd.f32 0.0, %v622
        %v624 = vpop.f32.mrf.mxu0
        %v625 = vpop.f32.mrf.mxu0
        %v626 = vadd.f32 0.0, %v625
        %v627 = vpop.f32.mrf.mxu0
        %628 = vmatprep.mubr.bf16.mxu0 0
        %629 = vmatmul.mubr.bf16.gmra.mxu0 %v533
        %v630 = vpop.f32.mrf.mxu0
        %v631 = vadd.f32 0.0, %v630
        %v632 = vpop.f32.mrf.mxu0
        %v633 = vpop.f32.mrf.mxu0
        %v634 = vadd.f32 0.0, %v633
        %v635 = vpop.f32.mrf.mxu0
        %636 = vmatprep.mubr.bf16.mxu0 0
        %637 = vmatmul.mubr.bf16.gmra.mxu0 %v534
        %v638 = vpop.f32.mrf.mxu0
        %v639 = vadd.f32 0.0, %v638
        %v640 = vpop.f32.mrf.mxu0
        %v641 = vpop.f32.mrf.mxu0
        %v642 = vadd.f32 0.0, %v641
        %v643 = vpop.f32.mrf.mxu0
        %644 = vmatprep.mubr.bf16.mxu0 0
        %645 = vmatmul.mubr.bf16.gmra.mxu0 %v535
        %v646 = vpop.f32.mrf.mxu0
        %v647 = vadd.f32 0.0, %v646
        %v648 = vpop.f32.mrf.mxu0
        %v649 = vpop.f32.mrf.mxu0
        %v650 = vadd.f32 0.0, %v649
        %v651 = vpop.f32.mrf.mxu0
        %652 = vmatprep.mubr.bf16.mxu0 0
        %653 = vmatmul.mubr.bf16.gmra.mxu0 %v536
        %v654 = vpop.f32.mrf.mxu0
        %v655 = vadd.f32 0.0, %v654
        %v656 = vpop.f32.mrf.mxu0
        %v657 = vpop.f32.mrf.mxu0
        %v658 = vadd.f32 0.0, %v657
        %v659 = vpop.f32.mrf.mxu0
        %660 = vmatprep.mubr.bf16.mxu0 0
        %661 = vmatmul.mubr.bf16.gmra.mxu0 %v537
        %v662 = vpop.f32.mrf.mxu0
        %v663 = vadd.f32 0.0, %v662
        %v664 = vpop.f32.mrf.mxu0
        %v665 = vpop.f32.mrf.mxu0
        %v666 = vadd.f32 0.0, %v665
        %v667 = vpop.f32.mrf.mxu0
        %668 = vmatprep.mubr.bf16.mxu0 0
        %669 = vmatmul.mubr.bf16.gmra.mxu0 %v538
        %v670 = vpop.f32.mrf.mxu0
        %v671 = vadd.f32 0.0, %v670
        %v672 = vpop.f32.mrf.mxu0
        %v673 = vpop.f32.mrf.mxu0
        %v674 = vadd.f32 0.0, %v673
        %v675 = vpop.f32.mrf.mxu0
        %676 = vmatprep.mubr.bf16.mxu0 0
        %677 = vmatmul.mubr.bf16.gmra.mxu0 %v539
        %v678 = vpop.f32.mrf.mxu0
        %v679 = vadd.f32 0.0, %v678
        %v680 = vpop.f32.mrf.mxu0
        %v681 = vpop.f32.mrf.mxu0
        %v682 = vadd.f32 0.0, %v681
        %v683 = vpop.f32.mrf.mxu0
        %684 = vdwg.mxu0
        %v685 = vadd.f32 %v516, %v623
        %v686 = vadd.f32 %v517, %v626
        %v687 = vadd.f32 %v518, %v631
        %v688 = vadd.f32 %v519, %v634
        %v689 = vadd.f32 %v520, %v639
        %v690 = vadd.f32 %v521, %v642
        %v691 = vadd.f32 %v522, %v647
        %v692 = vadd.f32 %v523, %v650
        %v693 = vadd.f32 %v524, %v655
        %v694 = vadd.f32 %v525, %v658
        %v695 = vadd.f32 %v526, %v663
        %v696 = vadd.f32 %v527, %v666
        %v697 = vadd.f32 %v528, %v671
        %v698 = vadd.f32 %v529, %v674
        %v699 = vadd.f32 %v530, %v679
        %v700 = vadd.f32 %v531, %v682
        %701 = vst [vmem:[#allocation3] sm:$0xff] %v685
        %702 = vst [vmem:[#allocation3 + $0x8] sm:$0xff] %v686
        %703 = vst [vmem:[#allocation3 + $0x10] sm:$0xff] %v687
        %704 = vst [vmem:[#allocation3 + $0x18] sm:$0xff] %v688
        %705 = vst [vmem:[#allocation3 + $0x20] sm:$0xff] %v689
        %706 = vst [vmem:[#allocation3 + $0x28] sm:$0xff] %v690
        %707 = vst [vmem:[#allocation3 + $0x30] sm:$0xff] %v691
        %708 = vst [vmem:[#allocation3 + $0x38] sm:$0xff] %v692
        %709 = vst [vmem:[#allocation3 + $0x40] sm:$0xff] %v693
        %710 = vst [vmem:[#allocation3 + $0x48] sm:$0xff] %v694
        %711 = vst [vmem:[#allocation3 + $0x50] sm:$0xff] %v695
        %712 = vst [vmem:[#allocation3 + $0x58] sm:$0xff] %v696
        %713 = vst [vmem:[#allocation3 + $0x60] sm:$0xff] %v697
        %714 = vst [vmem:[#allocation3 + $0x68] sm:$0xff] %v698
        %715 = vst [vmem:[#allocation3 + $0x70] sm:$0xff] %v699
        %716 = vst [vmem:[#allocation3 + $0x78] sm:$0xff] %v700
      $region120: #{_lambda_.1} parent=39 // pred_fallthru
        _
      // Predicated region
      $region121: #{_lambda_.1} parent=39 // pred_check
        %p717 = pneg %p337
      $region122: #{_lambda_.1} parent=39 // pred_check_branch
        %719 = sbr.rel (%p717) target = $region124
      $region123: #{_lambda_.1} parent=39 // pred_region
        %s720 = smul.u32 %s332, 128
        %s721 = smul.u32 %s26, 128
        %s722 = sadd.s32 %s720, %s721
        %s723 = sshra.s32 %s722, 3
        %s724 = sand.u32 %s722, 7
        %s725 = smul.addr %s723, 4
        %s726 = scalar_lea.vmem [#allocation4], %s725
        %v727 = vld [vmem:[%s726] sm:$0xf]
        %v728 = vld [vmem:[%s726 + $0x4] sm:$0xf]
        %v729 = vld [vmem:[%s726 + $0x8] sm:$0xf]
        %v730 = vld [vmem:[%s726 + $0xc] sm:$0xf]
        %v731 = vld [vmem:[%s726 + $0x10] sm:$0xf]
        %v732 = vld [vmem:[%s726 + $0x14] sm:$0xf]
        %v733 = vld [vmem:[%s726 + $0x18] sm:$0xf]
        %v734 = vld [vmem:[%s726 + $0x1c] sm:$0xf]
        %v735 = vld [vmem:[%s726 + $0x20] sm:$0xf]
        %v736 = vld [vmem:[%s726 + $0x24] sm:$0xf]
        %v737 = vld [vmem:[%s726 + $0x28] sm:$0xf]
        %v738 = vld [vmem:[%s726 + $0x2c] sm:$0xf]
        %v739 = vld [vmem:[%s726 + $0x30] sm:$0xf]
        %v740 = vld [vmem:[%s726 + $0x34] sm:$0xf]
        %v741 = vld [vmem:[%s726 + $0x38] sm:$0xf]
        %v742 = vld [vmem:[%s726 + $0x3c] sm:$0xf]
        %v743 = vld [vmem:[#allocation3] sm:$0xff]
        %v744 = vld [vmem:[#allocation3 + $0x8] sm:$0xff]
        %v745 = vld [vmem:[#allocation3 + $0x10] sm:$0xff]
        %v746 = vld [vmem:[#allocation3 + $0x18] sm:$0xff]
        %v747 = vld [vmem:[#allocation3 + $0x20] sm:$0xff]
        %v748 = vld [vmem:[#allocation3 + $0x28] sm:$0xff]
        %v749 = vld [vmem:[#allocation3 + $0x30] sm:$0xff]
        %v750 = vld [vmem:[#allocation3 + $0x38] sm:$0xff]
        %v751 = vld [vmem:[#allocation3 + $0x40] sm:$0xff]
        %v752 = vld [vmem:[#allocation3 + $0x48] sm:$0xff]
        %v753 = vld [vmem:[#allocation3 + $0x50] sm:$0xff]
        %v754 = vld [vmem:[#allocation3 + $0x58] sm:$0xff]
        %v755 = vld [vmem:[#allocation3 + $0x60] sm:$0xff]
        %v756 = vld [vmem:[#allocation3 + $0x68] sm:$0xff]
        %v757 = vld [vmem:[#allocation3 + $0x70] sm:$0xff]
        %v758 = vld [vmem:[#allocation3 + $0x78] sm:$0xff]
        %v759 = vld [vmem:[%s311] sm:$0xff]
        %v760 = vld [vmem:[%s311 + $0x8] sm:$0xff]
        %v761 = vld [vmem:[%s311 + $0x10] sm:$0xff]
        %v762 = vld [vmem:[%s311 + $0x18] sm:$0xff]
        %v763 = vld [vmem:[%s311 + $0x20] sm:$0xff]
        %v764 = vld [vmem:[%s311 + $0x28] sm:$0xff]
        %v765 = vld [vmem:[%s311 + $0x30] sm:$0xff]
        %v766 = vld [vmem:[%s311 + $0x38] sm:$0xff]
        %v767 = vld [vmem:[%s311 + $0x40] sm:$0xff]
        %v768 = vld [vmem:[%s311 + $0x48] sm:$0xff]
        %v769 = vld [vmem:[%s311 + $0x50] sm:$0xff]
        %v770 = vld [vmem:[%s311 + $0x58] sm:$0xff]
        %v771 = vld [vmem:[%s311 + $0x60] sm:$0xff]
        %v772 = vld [vmem:[%s311 + $0x68] sm:$0xff]
        %v773 = vld [vmem:[%s311 + $0x70] sm:$0xff]
        %v774 = vld [vmem:[%s311 + $0x78] sm:$0xff]
        %776 = vset.pattern.permute.xlu0 0
        %777 = vperm.xlu0 %776, %v759
        %v778 = vpop.permute.xlu0 %777
        %781 = vset.pattern.permute.xlu0 0
        %782 = vperm.xlu0 %781, %v760
        %v783 = vpop.permute.xlu0 %782
        %786 = vset.pattern.permute.xlu0 0
        %787 = vperm.xlu0 %786, %v761
        %v788 = vpop.permute.xlu0 %787
        %791 = vset.pattern.permute.xlu0 0
        %792 = vperm.xlu0 %791, %v762
        %v793 = vpop.permute.xlu0 %792
        %796 = vset.pattern.permute.xlu0 0
        %797 = vperm.xlu0 %796, %v763
        %v798 = vpop.permute.xlu0 %797
        %801 = vset.pattern.permute.xlu0 0
        %802 = vperm.xlu0 %801, %v764
        %v803 = vpop.permute.xlu0 %802
        %806 = vset.pattern.permute.xlu0 0
        %807 = vperm.xlu0 %806, %v765
        %v808 = vpop.permute.xlu0 %807
        %811 = vset.pattern.permute.xlu0 0
        %812 = vperm.xlu0 %811, %v766
        %v813 = vpop.permute.xlu0 %812
        %816 = vset.pattern.permute.xlu0 0
        %817 = vperm.xlu0 %816, %v767
        %v818 = vpop.permute.xlu0 %817
        %821 = vset.pattern.permute.xlu0 0
        %822 = vperm.xlu0 %821, %v768
        %v823 = vpop.permute.xlu0 %822
        %826 = vset.pattern.permute.xlu0 0
        %827 = vperm.xlu0 %826, %v769
        %v828 = vpop.permute.xlu0 %827
        %831 = vset.pattern.permute.xlu0 0
        %832 = vperm.xlu0 %831, %v770
        %v833 = vpop.permute.xlu0 %832
        %836 = vset.pattern.permute.xlu0 0
        %837 = vperm.xlu0 %836, %v771
        %v838 = vpop.permute.xlu0 %837
        %841 = vset.pattern.permute.xlu0 0
        %842 = vperm.xlu0 %841, %v772
        %v843 = vpop.permute.xlu0 %842
        %846 = vset.pattern.permute.xlu0 0
        %847 = vperm.xlu0 %846, %v773
        %v848 = vpop.permute.xlu0 %847
        %851 = vset.pattern.permute.xlu0 0
        %852 = vperm.xlu0 %851, %v774
        %v853 = vpop.permute.xlu0 %852
        %v855 = vmul.f32 %v743, %v778
        %v856 = vmul.f32 %v744, %v783
        %v857 = vmul.f32 %v745, %v788
        %v858 = vmul.f32 %v746, %v793
        %v859 = vmul.f32 %v747, %v798
        %v860 = vmul.f32 %v748, %v803
        %v861 = vmul.f32 %v749, %v808
        %v862 = vmul.f32 %v750, %v813
        %v863 = vmul.f32 %v751, %v818
        %v864 = vmul.f32 %v752, %v823
        %v865 = vmul.f32 %v753, %v828
        %v866 = vmul.f32 %v754, %v833
        %v867 = vmul.f32 %v755, %v838
        %v868 = vmul.f32 %v756, %v843
        %v869 = vmul.f32 %v757, %v848
        %v870 = vmul.f32 %v758, %v853
        %v871 = vpack.c.bf16 %v856, %v855
        %v872 = vpack.c.bf16 %v858, %v857
        %v873 = vpack.c.bf16 %v860, %v859
        %v874 = vpack.c.bf16 %v862, %v861
        %v875 = vpack.c.bf16 %v864, %v863
        %v876 = vpack.c.bf16 %v866, %v865
        %v877 = vpack.c.bf16 %v868, %v867
        %v878 = vpack.c.bf16 %v870, %v869
        %v879 = vld [vmem:[%s295] sm:$0xf]
        %v880 = vld [vmem:[%s295 + $0x4] sm:$0xf]
        %v881 = vld [vmem:[%s295 + $0x8] sm:$0xf]
        %v882 = vld [vmem:[%s295 + $0xc] sm:$0xf]
        %v883 = vld [vmem:[%s295 + $0x10] sm:$0xf]
        %v884 = vld [vmem:[%s295 + $0x14] sm:$0xf]
        %v885 = vld [vmem:[%s295 + $0x18] sm:$0xf]
        %v886 = vld [vmem:[%s295 + $0x1c] sm:$0xf]
        %v887 = vld [vmem:[%s295 + $0x20] sm:$0xf]
        %v888 = vld [vmem:[%s295 + $0x24] sm:$0xf]
        %v889 = vld [vmem:[%s295 + $0x28] sm:$0xf]
        %v890 = vld [vmem:[%s295 + $0x2c] sm:$0xf]
        %v891 = vld [vmem:[%s295 + $0x30] sm:$0xf]
        %v892 = vld [vmem:[%s295 + $0x34] sm:$0xf]
        %v893 = vld [vmem:[%s295 + $0x38] sm:$0xf]
        %v894 = vld [vmem:[%s295 + $0x3c] sm:$0xf]
        %v895 = vld [vmem:[%s300] sm:$0xf]
        %v896 = vld [vmem:[%s300 + $0x4] sm:$0xf]
        %v897 = vld [vmem:[%s300 + $0x8] sm:$0xf]
        %v898 = vld [vmem:[%s300 + $0xc] sm:$0xf]
        %v899 = vld [vmem:[%s300 + $0x10] sm:$0xf]
        %v900 = vld [vmem:[%s300 + $0x14] sm:$0xf]
        %v901 = vld [vmem:[%s300 + $0x18] sm:$0xf]
        %v902 = vld [vmem:[%s300 + $0x1c] sm:$0xf]
        %v903 = vld [vmem:[%s300 + $0x20] sm:$0xf]
        %v904 = vld [vmem:[%s300 + $0x24] sm:$0xf]
        %v905 = vld [vmem:[%s300 + $0x28] sm:$0xf]
        %v906 = vld [vmem:[%s300 + $0x2c] sm:$0xf]
        %v907 = vld [vmem:[%s300 + $0x30] sm:$0xf]
        %v908 = vld [vmem:[%s300 + $0x34] sm:$0xf]
        %v909 = vld [vmem:[%s300 + $0x38] sm:$0xf]
        %v910 = vld [vmem:[%s300 + $0x3c] sm:$0xf]
        %v927 = vunpack.c.l.b16 %v727
        %v928 = vunpack.c.l.b16 %v728
        %v929 = vunpack.c.l.b16 %v729
        %v930 = vunpack.c.l.b16 %v730
        %v931 = vunpack.c.l.b16 %v731
        %v932 = vunpack.c.l.b16 %v732
        %v933 = vunpack.c.l.b16 %v733
        %v934 = vunpack.c.l.b16 %v734
        %v935 = vunpack.c.l.b16 %v735
        %v936 = vunpack.c.l.b16 %v736
        %v937 = vunpack.c.l.b16 %v737
        %v938 = vunpack.c.l.b16 %v738
        %v939 = vunpack.c.l.b16 %v739
        %v940 = vunpack.c.l.b16 %v740
        %v941 = vunpack.c.l.b16 %v741
        %v942 = vunpack.c.l.b16 %v742
        %v943 = vpack.c.b16 %v928, %v927
        %v944 = vpack.c.b16 %v930, %v929
        %v945 = vpack.c.b16 %v932, %v931
        %v946 = vpack.c.b16 %v934, %v933
        %v947 = vpack.c.b16 %v936, %v935
        %v948 = vpack.c.b16 %v938, %v937
        %v949 = vpack.c.b16 %v940, %v939
        %v950 = vpack.c.b16 %v942, %v941
        %v975 = vunpack.c.l.b16 %v895
        %v976 = vunpack.c.l.b16 %v896
        %v977 = vunpack.c.l.b16 %v897
        %v978 = vunpack.c.l.b16 %v898
        %v979 = vunpack.c.l.b16 %v899
        %v980 = vunpack.c.l.b16 %v900
        %v981 = vunpack.c.l.b16 %v901
        %v982 = vunpack.c.l.b16 %v902
        %v983 = vunpack.c.l.b16 %v903
        %v984 = vunpack.c.l.b16 %v904
        %v985 = vunpack.c.l.b16 %v905
        %v986 = vunpack.c.l.b16 %v906
        %v987 = vunpack.c.l.b16 %v907
        %v988 = vunpack.c.l.b16 %v908
        %v989 = vunpack.c.l.b16 %v909
        %v990 = vunpack.c.l.b16 %v910
        %v991 = vpack.c.b16 %v976, %v975
        %v992 = vpack.c.b16 %v978, %v977
        %v993 = vpack.c.b16 %v980, %v979
        %v994 = vpack.c.b16 %v982, %v981
        %v995 = vpack.c.b16 %v984, %v983
        %v996 = vpack.c.b16 %v986, %v985
        %v997 = vpack.c.b16 %v988, %v987
        %v998 = vpack.c.b16 %v990, %v989
        %1007 = vmatprep.subr.bf16.mxu0 0
        %1008 = vmatpush1.bf16.msra.mxu0 %v998
        %1009 = vmatprep.subr.bf16.mxu0 0
        %1010 = vmatpush1.bf16.msra.mxu0 %v997
        %1011 = vmatprep.subr.bf16.mxu0 0
        %1012 = vmatpush1.bf16.msra.mxu0 %v996
        %1013 = vmatprep.subr.bf16.mxu0 0
        %1014 = vmatpush1.bf16.msra.mxu0 %v995
        %1015 = vmatprep.subr.bf16.mxu0 0
        %1016 = vmatpush1.bf16.msra.mxu0 %v994
        %1017 = vmatprep.subr.bf16.mxu0 0
        %1018 = vmatpush1.bf16.msra.mxu0 %v993
        %1019 = vmatprep.subr.bf16.mxu0 0
        %1020 = vmatpush1.bf16.msra.mxu0 %v992
        %1021 = vmatprep.subr.bf16.mxu0 0
        %1022 = vmatpush1.bf16.msra.mxu0 %v991
        %1023 = vmatprep.subr.bf16.mxu0 0
        %1024 = vmatpush2.bf16.msra.mxu0 0
        %1025 = vmatprep.subr.bf16.mxu0 0
        %1026 = vmatpush2.bf16.msra.mxu0 0
        %1027 = vmatprep.subr.bf16.mxu0 0
        %1028 = vmatpush2.bf16.msra.mxu0 0
        %1029 = vmatprep.subr.bf16.mxu0 0
        %1030 = vmatpush2.bf16.msra.mxu0 0
        %1031 = vmatprep.subr.bf16.mxu0 0
        %1032 = vmatpush2.bf16.msra.mxu0 0
        %1033 = vmatprep.subr.bf16.mxu0 0
        %1034 = vmatpush2.bf16.msra.mxu0 0
        %1035 = vmatprep.subr.bf16.mxu0 0
        %1036 = vmatpush2.bf16.msra.mxu0 0
        %1037 = vmatprep.subr.bf16.mxu0 0
        %1038 = vmatpush2.bf16.msra.mxu0 0
        %1039 = vmatprep.mubr.bf16.mxu0 0
        %1040 = vmatmul.mubr.bf16.gmra.mxu0 %v943
        %v1041 = vpop.f32.mrf.mxu0
        %v1042 = vadd.f32 0.0, %v1041
        %v1043 = vpop.f32.mrf.mxu0
        %v1044 = vpop.f32.mrf.mxu0
        %v1045 = vadd.f32 0.0, %v1044
        %v1046 = vpop.f32.mrf.mxu0
        %1047 = vmatprep.mubr.bf16.mxu0 0
        %1048 = vmatmul.mubr.bf16.gmra.mxu0 %v944
        %v1049 = vpop.f32.mrf.mxu0
        %v1050 = vadd.f32 0.0, %v1049
        %v1051 = vpop.f32.mrf.mxu0
        %v1052 = vpop.f32.mrf.mxu0
        %v1053 = vadd.f32 0.0, %v1052
        %v1054 = vpop.f32.mrf.mxu0
        %1055 = vmatprep.mubr.bf16.mxu0 0
        %1056 = vmatmul.mubr.bf16.gmra.mxu0 %v945
        %v1057 = vpop.f32.mrf.mxu0
        %v1058 = vadd.f32 0.0, %v1057
        %v1059 = vpop.f32.mrf.mxu0
        %v1060 = vpop.f32.mrf.mxu0
        %v1061 = vadd.f32 0.0, %v1060
        %v1062 = vpop.f32.mrf.mxu0
        %1063 = vmatprep.mubr.bf16.mxu0 0
        %1064 = vmatmul.mubr.bf16.gmra.mxu0 %v946
        %v1065 = vpop.f32.mrf.mxu0
        %v1066 = vadd.f32 0.0, %v1065
        %v1067 = vpop.f32.mrf.mxu0
        %v1068 = vpop.f32.mrf.mxu0
        %v1069 = vadd.f32 0.0, %v1068
        %v1070 = vpop.f32.mrf.mxu0
        %1071 = vmatprep.mubr.bf16.mxu0 0
        %1072 = vmatmul.mubr.bf16.gmra.mxu0 %v947
        %v1073 = vpop.f32.mrf.mxu0
        %v1074 = vadd.f32 0.0, %v1073
        %v1075 = vpop.f32.mrf.mxu0
        %v1076 = vpop.f32.mrf.mxu0
        %v1077 = vadd.f32 0.0, %v1076
        %v1078 = vpop.f32.mrf.mxu0
        %1079 = vmatprep.mubr.bf16.mxu0 0
        %1080 = vmatmul.mubr.bf16.gmra.mxu0 %v948
        %v1081 = vpop.f32.mrf.mxu0
        %v1082 = vadd.f32 0.0, %v1081
        %v1083 = vpop.f32.mrf.mxu0
        %v1084 = vpop.f32.mrf.mxu0
        %v1085 = vadd.f32 0.0, %v1084
        %v1086 = vpop.f32.mrf.mxu0
        %1087 = vmatprep.mubr.bf16.mxu0 0
        %1088 = vmatmul.mubr.bf16.gmra.mxu0 %v949
        %v1089 = vpop.f32.mrf.mxu0
        %v1090 = vadd.f32 0.0, %v1089
        %v1091 = vpop.f32.mrf.mxu0
        %v1092 = vpop.f32.mrf.mxu0
        %v1093 = vadd.f32 0.0, %v1092
        %v1094 = vpop.f32.mrf.mxu0
        %1095 = vmatprep.mubr.bf16.mxu0 0
        %1096 = vmatmul.mubr.bf16.gmra.mxu0 %v950
        %v1097 = vpop.f32.mrf.mxu0
        %v1098 = vadd.f32 0.0, %v1097
        %v1099 = vpop.f32.mrf.mxu0
        %v1100 = vpop.f32.mrf.mxu0
        %v1101 = vadd.f32 0.0, %v1100
        %v1102 = vpop.f32.mrf.mxu0
        %1103 = vdwg.mxu0
        %v1120 = vunpack.c.l.b16 %v879
        %v1121 = vunpack.c.l.b16 %v880
        %v1122 = vunpack.c.l.b16 %v881
        %v1123 = vunpack.c.l.b16 %v882
        %v1124 = vunpack.c.l.b16 %v883
        %v1125 = vunpack.c.l.b16 %v884
        %v1126 = vunpack.c.l.b16 %v885
        %v1127 = vunpack.c.l.b16 %v886
        %v1128 = vunpack.c.l.b16 %v887
        %v1129 = vunpack.c.l.b16 %v888
        %v1130 = vunpack.c.l.b16 %v889
        %v1131 = vunpack.c.l.b16 %v890
        %v1132 = vunpack.c.l.b16 %v891
        %v1133 = vunpack.c.l.b16 %v892
        %v1134 = vunpack.c.l.b16 %v893
        %v1135 = vunpack.c.l.b16 %v894
        %v1136 = vpack.c.b16 %v1121, %v1120
        %v1137 = vpack.c.b16 %v1123, %v1122
        %v1138 = vpack.c.b16 %v1125, %v1124
        %v1139 = vpack.c.b16 %v1127, %v1126
        %v1140 = vpack.c.b16 %v1129, %v1128
        %v1141 = vpack.c.b16 %v1131, %v1130
        %v1142 = vpack.c.b16 %v1133, %v1132
        %v1143 = vpack.c.b16 %v1135, %v1134
        %1152 = vmatprep.subr.bf16.mxu0 0
        %1153 = vmatpush1.bf16.msra.mxu0 %v1143
        %1154 = vmatprep.subr.bf16.mxu0 0
        %1155 = vmatpush1.bf16.msra.mxu0 %v1142
        %1156 = vmatprep.subr.bf16.mxu0 0
        %1157 = vmatpush1.bf16.msra.mxu0 %v1141
        %1158 = vmatprep.subr.bf16.mxu0 0
        %1159 = vmatpush1.bf16.msra.mxu0 %v1140
        %1160 = vmatprep.subr.bf16.mxu0 0
        %1161 = vmatpush1.bf16.msra.mxu0 %v1139
        %1162 = vmatprep.subr.bf16.mxu0 0
        %1163 = vmatpush1.bf16.msra.mxu0 %v1138
        %1164 = vmatprep.subr.bf16.mxu0 0
        %1165 = vmatpush1.bf16.msra.mxu0 %v1137
        %1166 = vmatprep.subr.bf16.mxu0 0
        %1167 = vmatpush1.bf16.msra.mxu0 %v1136
        %1168 = vmatprep.subr.bf16.mxu0 0
        %1169 = vmatpush2.bf16.msra.mxu0 0
        %1170 = vmatprep.subr.bf16.mxu0 0
        %1171 = vmatpush2.bf16.msra.mxu0 0
        %1172 = vmatprep.subr.bf16.mxu0 0
        %1173 = vmatpush2.bf16.msra.mxu0 0
        %1174 = vmatprep.subr.bf16.mxu0 0
        %1175 = vmatpush2.bf16.msra.mxu0 0
        %1176 = vmatprep.subr.bf16.mxu0 0
        %1177 = vmatpush2.bf16.msra.mxu0 0
        %1178 = vmatprep.subr.bf16.mxu0 0
        %1179 = vmatpush2.bf16.msra.mxu0 0
        %1180 = vmatprep.subr.bf16.mxu0 0
        %1181 = vmatpush2.bf16.msra.mxu0 0
        %1182 = vmatprep.subr.bf16.mxu0 0
        %1183 = vmatpush2.bf16.msra.mxu0 0
        %1184 = vmatprep.mubr.bf16.mxu0 0
        %1185 = vmatmul.mubr.bf16.gmra.mxu0 %v871
        %v1186 = vpop.f32.mrf.mxu0
        %v1187 = vadd.f32 %v1042, %v1186
        %v1188 = vpop.f32.mrf.mxu0
        %v1189 = vpop.f32.mrf.mxu0
        %v1190 = vadd.f32 %v1045, %v1189
        %v1191 = vpop.f32.mrf.mxu0
        %1192 = vmatprep.mubr.bf16.mxu0 0
        %1193 = vmatmul.mubr.bf16.gmra.mxu0 %v872
        %v1194 = vpop.f32.mrf.mxu0
        %v1195 = vadd.f32 %v1050, %v1194
        %v1196 = vpop.f32.mrf.mxu0
        %v1197 = vpop.f32.mrf.mxu0
        %v1198 = vadd.f32 %v1053, %v1197
        %v1199 = vpop.f32.mrf.mxu0
        %1200 = vmatprep.mubr.bf16.mxu0 0
        %1201 = vmatmul.mubr.bf16.gmra.mxu0 %v873
        %v1202 = vpop.f32.mrf.mxu0
        %v1203 = vadd.f32 %v1058, %v1202
        %v1204 = vpop.f32.mrf.mxu0
        %v1205 = vpop.f32.mrf.mxu0
        %v1206 = vadd.f32 %v1061, %v1205
        %v1207 = vpop.f32.mrf.mxu0
        %1208 = vmatprep.mubr.bf16.mxu0 0
        %1209 = vmatmul.mubr.bf16.gmra.mxu0 %v874
        %v1210 = vpop.f32.mrf.mxu0
        %v1211 = vadd.f32 %v1066, %v1210
        %v1212 = vpop.f32.mrf.mxu0
        %v1213 = vpop.f32.mrf.mxu0
        %v1214 = vadd.f32 %v1069, %v1213
        %v1215 = vpop.f32.mrf.mxu0
        %1216 = vmatprep.mubr.bf16.mxu0 0
        %1217 = vmatmul.mubr.bf16.gmra.mxu0 %v875
        %v1218 = vpop.f32.mrf.mxu0
        %v1219 = vadd.f32 %v1074, %v1218
        %v1220 = vpop.f32.mrf.mxu0
        %v1221 = vpop.f32.mrf.mxu0
        %v1222 = vadd.f32 %v1077, %v1221
        %v1223 = vpop.f32.mrf.mxu0
        %1224 = vmatprep.mubr.bf16.mxu0 0
        %1225 = vmatmul.mubr.bf16.gmra.mxu0 %v876
        %v1226 = vpop.f32.mrf.mxu0
        %v1227 = vadd.f32 %v1082, %v1226
        %v1228 = vpop.f32.mrf.mxu0
        %v1229 = vpop.f32.mrf.mxu0
        %v1230 = vadd.f32 %v1085, %v1229
        %v1231 = vpop.f32.mrf.mxu0
        %1232 = vmatprep.mubr.bf16.mxu0 0
        %1233 = vmatmul.mubr.bf16.gmra.mxu0 %v877
        %v1234 = vpop.f32.mrf.mxu0
        %v1235 = vadd.f32 %v1090, %v1234
        %v1236 = vpop.f32.mrf.mxu0
        %v1237 = vpop.f32.mrf.mxu0
        %v1238 = vadd.f32 %v1093, %v1237
        %v1239 = vpop.f32.mrf.mxu0
        %1240 = vmatprep.mubr.bf16.mxu0 0
        %1241 = vmatmul.mubr.bf16.gmra.mxu0 %v878
        %v1242 = vpop.f32.mrf.mxu0
        %v1243 = vadd.f32 %v1098, %v1242
        %v1244 = vpop.f32.mrf.mxu0
        %v1245 = vpop.f32.mrf.mxu0
        %v1246 = vadd.f32 %v1101, %v1245
        %v1247 = vpop.f32.mrf.mxu0
        %1248 = vdwg.mxu0
        %v1249 = vld [vmem:[%s303] sm:$0x1]
        %v1251 = vlaneseq
        %v1252 = vshrl.u32 %v1251, 7
        %v1253 = vsub.s32 0, %v1252
        %v1254 = vrot.slane %v1249, %v1253
        %v1256 = vmul.f32 %v1187, %v1254
        %v1257 = vmul.f32 %v1190, %v1254
        %v1258 = vmul.f32 %v1195, %v1254
        %v1259 = vmul.f32 %v1198, %v1254
        %v1260 = vmul.f32 %v1203, %v1254
        %v1261 = vmul.f32 %v1206, %v1254
        %v1262 = vmul.f32 %v1211, %v1254
        %v1263 = vmul.f32 %v1214, %v1254
        %v1264 = vmul.f32 %v1219, %v1254
        %v1265 = vmul.f32 %v1222, %v1254
        %v1266 = vmul.f32 %v1227, %v1254
        %v1267 = vmul.f32 %v1230, %v1254
        %v1268 = vmul.f32 %v1235, %v1254
        %v1269 = vmul.f32 %v1238, %v1254
        %v1270 = vmul.f32 %v1243, %v1254
        %v1271 = vmul.f32 %v1246, %v1254
        %v1272 = vld [vmem:[%s306] sm:$0x1]
        %v1274 = vlaneseq
        %v1275 = vshrl.u32 %v1274, 7
        %v1276 = vsub.s32 0, %v1275
        %v1277 = vrot.slane %v1272, %v1276
        %v1279 = vadd.f32 %v1256, %v1277
        %v1280 = vadd.f32 %v1257, %v1277
        %v1281 = vadd.f32 %v1258, %v1277
        %v1282 = vadd.f32 %v1259, %v1277
        %v1283 = vadd.f32 %v1260, %v1277
        %v1284 = vadd.f32 %v1261, %v1277
        %v1285 = vadd.f32 %v1262, %v1277
        %v1286 = vadd.f32 %v1263, %v1277
        %v1287 = vadd.f32 %v1264, %v1277
        %v1288 = vadd.f32 %v1265, %v1277
        %v1289 = vadd.f32 %v1266, %v1277
        %v1290 = vadd.f32 %v1267, %v1277
        %v1291 = vadd.f32 %v1268, %v1277
        %v1292 = vadd.f32 %v1269, %v1277
        %v1293 = vadd.f32 %v1270, %v1277
        %v1294 = vadd.f32 %v1271, %v1277
        %p1295 = scmp.eq.s32.totalorder %s25, 2
        %p1296 = scmp.ne.s32.totalorder %s25, 2
        // Predicated region
        $region125: #{_lambda_.1} parent=123 // pred_check
          %p1297 = pneg %p1296
        $region126: #{_lambda_.1} parent=123 // pred_check_branch
          %1299 = sbr.rel (%p1297) target = $region128
        $region127: #{_lambda_.1} parent=123 // pred_region
          %s1300 = smul.u32 %s331, 128
          %s1301 = sadd.s32 %s1300, %s721
          %v1302 = vmax.f32 %v1279, 0.0
          %v1303 = vmax.f32 %v1280, 0.0
          %v1304 = vmax.f32 %v1281, 0.0
          %v1305 = vmax.f32 %v1282, 0.0
          %v1306 = vmax.f32 %v1283, 0.0
          %v1307 = vmax.f32 %v1284, 0.0
          %v1308 = vmax.f32 %v1285, 0.0
          %v1309 = vmax.f32 %v1286, 0.0
          %v1310 = vmax.f32 %v1287, 0.0
          %v1311 = vmax.f32 %v1288, 0.0
          %v1312 = vmax.f32 %v1289, 0.0
          %v1313 = vmax.f32 %v1290, 0.0
          %v1314 = vmax.f32 %v1291, 0.0
          %v1315 = vmax.f32 %v1292, 0.0
          %v1316 = vmax.f32 %v1293, 0.0
          %v1317 = vmax.f32 %v1294, 0.0
          %v1318 = vpack.c.bf16 %v1303, %v1302
          %v1319 = vpack.c.bf16 %v1305, %v1304
          %v1320 = vpack.c.bf16 %v1307, %v1306
          %v1321 = vpack.c.bf16 %v1309, %v1308
          %v1322 = vpack.c.bf16 %v1311, %v1310
          %v1323 = vpack.c.bf16 %v1313, %v1312
          %v1324 = vpack.c.bf16 %v1315, %v1314
          %v1325 = vpack.c.bf16 %v1317, %v1316
          %v1334 = vunpack.c.l.b16 %v1318
          %v1335 = vunpack.c.h.b16 %v1318
          %v1336 = vunpack.c.l.b16 %v1319
          %v1337 = vunpack.c.h.b16 %v1319
          %v1338 = vunpack.c.l.b16 %v1320
          %v1339 = vunpack.c.h.b16 %v1320
          %v1340 = vunpack.c.l.b16 %v1321
          %v1341 = vunpack.c.h.b16 %v1321
          %v1342 = vunpack.c.l.b16 %v1322
          %v1343 = vunpack.c.h.b16 %v1322
          %v1344 = vunpack.c.l.b16 %v1323
          %v1345 = vunpack.c.h.b16 %v1323
          %v1346 = vunpack.c.l.b16 %v1324
          %v1347 = vunpack.c.h.b16 %v1324
          %v1348 = vunpack.c.l.b16 %v1325
          %v1349 = vunpack.c.h.b16 %v1325
          %v1350 = vpack.c.b16 %v1334, %v1334
          %v1351 = vpack.c.b16 %v1335, %v1335
          %v1352 = vpack.c.b16 %v1336, %v1336
          %v1353 = vpack.c.b16 %v1337, %v1337
          %v1354 = vpack.c.b16 %v1338, %v1338
          %v1355 = vpack.c.b16 %v1339, %v1339
          %v1356 = vpack.c.b16 %v1340, %v1340
          %v1357 = vpack.c.b16 %v1341, %v1341
          %v1358 = vpack.c.b16 %v1342, %v1342
          %v1359 = vpack.c.b16 %v1343, %v1343
          %v1360 = vpack.c.b16 %v1344, %v1344
          %v1361 = vpack.c.b16 %v1345, %v1345
          %v1362 = vpack.c.b16 %v1346, %v1346
          %v1363 = vpack.c.b16 %v1347, %v1347
          %v1364 = vpack.c.b16 %v1348, %v1348
          %v1365 = vpack.c.b16 %v1349, %v1349
          %s1382 = sshra.s32 %s1301, 3
          %s1383 = sand.u32 %s1301, 7
          %s1384 = smul.addr %s1382, 4
          %s1385 = scalar_lea.vmem [#allocation4], %s1384
          %1386 = vst [vmem:[%s1385] sm:$0xf] %v1350
          %1387 = vst [vmem:[%s1385 + $0x4] sm:$0xf] %v1351
          %1388 = vst [vmem:[%s1385 + $0x8] sm:$0xf] %v1352
          %1389 = vst [vmem:[%s1385 + $0xc] sm:$0xf] %v1353
          %1390 = vst [vmem:[%s1385 + $0x10] sm:$0xf] %v1354
          %1391 = vst [vmem:[%s1385 + $0x14] sm:$0xf] %v1355
          %1392 = vst [vmem:[%s1385 + $0x18] sm:$0xf] %v1356
          %1393 = vst [vmem:[%s1385 + $0x1c] sm:$0xf] %v1357
          %1394 = vst [vmem:[%s1385 + $0x20] sm:$0xf] %v1358
          %1395 = vst [vmem:[%s1385 + $0x24] sm:$0xf] %v1359
          %1396 = vst [vmem:[%s1385 + $0x28] sm:$0xf] %v1360
          %1397 = vst [vmem:[%s1385 + $0x2c] sm:$0xf] %v1361
          %1398 = vst [vmem:[%s1385 + $0x30] sm:$0xf] %v1362
          %1399 = vst [vmem:[%s1385 + $0x34] sm:$0xf] %v1363
          %1400 = vst [vmem:[%s1385 + $0x38] sm:$0xf] %v1364
          %1401 = vst [vmem:[%s1385 + $0x3c] sm:$0xf] %v1365
        $region128: #{_lambda_.1} parent=123 // pred_fallthru
          _
        // Predicated region
        $region129: #{_lambda_.1} parent=123 // pred_check
          %p1402 = pneg %p1295
        $region130: #{_lambda_.1} parent=123 // pred_check_branch
          %1404 = sbr.rel (%p1402) target = $region132
        $region131: #{_lambda_.1} parent=123 // pred_region
          %1405 = vst [vmem:[%s317] sm:$0xff] %v1279
          %1406 = vst [vmem:[%s317 + $0x8] sm:$0xff] %v1280
          %1407 = vst [vmem:[%s317 + $0x10] sm:$0xff] %v1281
          %1408 = vst [vmem:[%s317 + $0x18] sm:$0xff] %v1282
          %1409 = vst [vmem:[%s317 + $0x20] sm:$0xff] %v1283
          %1410 = vst [vmem:[%s317 + $0x28] sm:$0xff] %v1284
          %1411 = vst [vmem:[%s317 + $0x30] sm:$0xff] %v1285
          %1412 = vst [vmem:[%s317 + $0x38] sm:$0xff] %v1286
          %1413 = vst [vmem:[%s317 + $0x40] sm:$0xff] %v1287
          %1414 = vst [vmem:[%s317 + $0x48] sm:$0xff] %v1288
          %1415 = vst [vmem:[%s317 + $0x50] sm:$0xff] %v1289
          %1416 = vst [vmem:[%s317 + $0x58] sm:$0xff] %v1290
          %1417 = vst [vmem:[%s317 + $0x60] sm:$0xff] %v1291
          %1418 = vst [vmem:[%s317 + $0x68] sm:$0xff] %v1292
          %1419 = vst [vmem:[%s317 + $0x70] sm:$0xff] %v1293
          %1420 = vst [vmem:[%s317 + $0x78] sm:$0xff] %v1294
        $region132: #{_lambda_.1} parent=123 // pred_fallthru
          _
      $region124: #{_lambda_.1} parent=39 // pred_fallthru
        _
      %s1421 = smul.u32 16, %s26
      %p1422 = scmp.lt.s32.totalorder %s1421, 15
      %s1423 = scalar_select %p1422, %s1421, 15
      %s1424 = smul.addr %s1423, 8
      %s1425 = scalar_lea.vmem %s8, %s1424
      // Predicated region
      $region133: #{_lambda_.1} parent=39 // pred_check
        %p1426 = pneg %p187
      $region134: #{_lambda_.1} parent=39 // pred_check_branch
        %1428 = sbr.rel (%p1426) target = $region136
      $region135: #{_lambda_.1} parent=39 // pred_region
        %s1429 = smul.u32 16, %s26
      $region136: #{_lambda_.1} parent=39 // pred_fallthru
        _
      // Predicated region
      $region137: #{_lambda_.1} parent=39 // pred_check
        %p1430 = pneg %p187
      $region138: #{_lambda_.1} parent=39 // pred_check_branch
        %1432 = sbr.rel (%p1430) target = $region140
      $region139: #{_lambda_.1} parent=39 // pred_region
        %s1433 = smul.u32 16, %s26
        %p1434 = scmp.lt.s32.totalorder %s1433, 15
        %s1435 = scalar_select %p1434, %s1433, 15
        %s1436 = smul.addr %s1435, 8
        %s1437 = scalar_lea.vmem %s8, %s1436
      $region140: #{_lambda_.1} parent=39 // pred_fallthru
        _
    $region40: #{_lambda_.1} parent=5 // pred_fallthru
      _
    %p1438 = scmp.le.s32.totalorder 2, %s15
    // Predicated region
    $region141: #{_lambda_.1} parent=5 // pred_check
      %p1439 = pneg %p1438
    $region142: #{_lambda_.1} parent=5 // pred_check_branch
      %1441 = sbr.rel (%p1439) target = $region144
    $region143: #{_lambda_.1} parent=5 // pred_region
      %s1442 = ssub.s32 %s15, 2
    $region144: #{_lambda_.1} parent=5 // pred_fallthru
      _
  $region6: #{_lambda_.1} parent=0 // loop_footer
    %s19 = sadd.s32 1, %s15
  $region7: #{_lambda_.1} parent=0 // loop_footer_branch
    %14 = sbr.rel target = $region3
  $region8: #{_lambda_.1} parent=0 // loop_exit
    _
  %1443 = vsyncmov [#allocation5]
  %s1444 = vpop.sfrf %1443
  %p1445 = scmp.eq.s32.totalorder %s1444, 0
  %p1446 = pneg %p1445
  %1448 = shalt.err (%p1446)
  %s1449 = scalar_lea.sflag [#allocation5], 1
  %1450 = vsyncmov %s1449
  %s1451 = vpop.sfrf %1450
  %p1452 = scmp.eq.s32.totalorder %s1451, 0
  %p1453 = pneg %p1452
  %1455 = shalt.err (%p1453)

</llo_original>
